<compile_context>
chip_gen: v5e
topology: v5e:2x2
jax: 0.10.0
libtpu: 0.0.40
codegen_flags: <defaults>
</compile_context>

<pallas_src>
import math
import jax
import jax.numpy as jnp
from jax.experimental import pallas as pl
from jax.experimental.pallas import tpu as pltpu


def _round_up(x, n):
    return ((x + n - 1) // n) * n


# ---------------------------------------------------------------------------
# Pallas kernel: fused gatedFusion forward for one tile of rows.
# ---------------------------------------------------------------------------
def gated_fusion_kernel(
    hs_ref, ht_ref,
    wxs_ref, wxt_ref, bg_ref,      # gate weights (BN folded), fused gate bias (f32)
    wh1_ref, bh1_ref,              # FC_h[0] folded: (D,D), (1,D) f32   -> ReLU
    wh2_ref, bh2_ref,              # FC_h[1] folded: (D,Dm_pad), (1,Dm_pad) f32
    out_ref,
):
    hs = hs_ref[...]                                   # (tm, D) storage dtype
    ht = ht_ref[...]                                   # (tm, D)

    # Gate: XS + XT = hs @ Wxs' + ht @ Wxt' + bg   (two K=D matmuls, f32 acc;
    # no lane-axis concat).
    s = jnp.dot(hs, wxs_ref[...], preferred_element_type=jnp.float32)
    s = s + jnp.dot(ht, wxt_ref[...], preferred_element_type=jnp.float32)
    s = s + bg_ref[...]                                # (tm, D) f32

    # sigmoid: exp on the EUP, divide replaced by approx reciprocal (EUP slot).
    z = pl.reciprocal(1.0 + jnp.exp(-s), approx=True)  # (tm, D) f32

    # Blend in f32: h = ht + z*(hs - ht)  (one multiply instead of two).
    hs_f = hs.astype(jnp.float32)
    ht_f = ht.astype(jnp.float32)
    h = ht_f + z * (hs_f - ht_f)                       # (tm, D) f32

    # FC_h layer 1: ReLU(H @ Wh1' + bh1')   (bf16 operands, f32 accumulate)
    h1 = jnp.dot(h.astype(wh1_ref.dtype), wh1_ref[...],
                 preferred_element_type=jnp.float32) + bh1_ref[...]
    h1 = jnp.maximum(h1, 0.0)

    # FC_h layer 2: H1 @ Wh2' + bh2'
    h2 = jnp.dot(h1.astype(wh2_ref.dtype), wh2_ref[...],
                 preferred_element_type=jnp.float32) + bh2_ref[...]

    out_ref[...] = h2.astype(out_ref.dtype)


# ---------------------------------------------------------------------------
# Host-side folding of eval-mode BatchNorm into the 1x1-conv weights/biases.
# ---------------------------------------------------------------------------
def fold_params(p, eps=1e-5):
    def bn_scale_shift(bn):
        scale = bn["gamma"] / jnp.sqrt(bn["var"] + eps)
        shift = bn["beta"] - bn["mean"] * scale
        return scale, shift

    sxs, oxs = bn_scale_shift(p["bn_xs"])
    sxt, oxt = bn_scale_shift(p["bn_xt"])
    sh1, oh1 = bn_scale_shift(p["bn_h1"])
    sh2, oh2 = bn_scale_shift(p["bn_h2"])
    return dict(
        wxs=p["wxs"] * sxs,                      # FC_xs has no bias
        wxt=p["wxt"] * sxt,
        bg=oxs + p["bxt"] * sxt + oxt,           # fused gate bias (1, D)
        wh1=p["wh1"] * sh1, bh1=p["bh1"] * sh1 + oh1,
        wh2=p["wh2"] * sh2, bh2=p["bh2"] * sh2 + oh2,
    )


# ---------------------------------------------------------------------------
# Tiling / VMEM budgeting.
# ---------------------------------------------------------------------------
def _choose_tiling(M, D, Dm_pad, itemsize, weight_bytes,
                   target_rows=512, vmem_budget_bytes=40 * (1 << 20)):
    # Per-row VMEM: 2 inputs x 2 buffers x D + 2 buffers x Dm_pad output.
    per_row = (4 * D + 2 * Dm_pad) * itemsize
    cap = (vmem_budget_bytes - 2 * weight_bytes) // max(per_row, 1)
    cap = max(16, (cap // 16) * 16)              # keep tm within the VMEM budget
    target = max(16, min(target_rows, cap))
    n_tiles = max(2, pl.cdiv(M, target))         # >= 2 grid steps for v7x megacore
    if n_tiles % 2:
        n_tiles += 1                             # even split across 2 TensorCores
    tm = _round_up(pl.cdiv(M, n_tiles), 16)      # sublane-friendly for bf16 & f32
    return n_tiles, tm


def _pallas_forward(hs2, ht2, consts, *, tm, n_tiles, D, Dm_pad, out_dtype,
                    vmem_limit, cost):
    M_pad = hs2.shape[0]

    def build(const_mode):
        row_in = pl.BlockSpec((tm, D), lambda i: (i, 0))
        row_out = pl.BlockSpec((tm, Dm_pad), lambda i: (i, 0))

        def const_spec(arr):
            kwargs = {} if const_mode is None else {"pipeline_mode": const_mode}
            return pl.BlockSpec(arr.shape, lambda i: (0,) * arr.ndim, **kwargs)

        grid_spec = pl.GridSpec(
            grid=(n_tiles,),
            in_specs=[row_in, row_in] + [const_spec(c) for c in consts],
            out_specs=row_out,
        )
        return pl.pallas_call(
            gated_fusion_kernel,
            out_shape=jax.ShapeDtypeStruct((M_pad, Dm_pad), out_dtype),
            grid_spec=grid_spec,
            compiler_params=pltpu.CompilerParams(
                dimension_semantics=("parallel",),
                vmem_limit_bytes=vmem_limit,
            ),
            cost_estimate=cost,
        )

    try:
        # Grid-invariant weights/biases: single-buffered (index_map is constant,
        # default double-buffering would just duplicate them in VMEM).
        out = build(pl.Buffered(1))(hs2, ht2, *consts)
        return jax.block_until_ready(out)
    except Exception:
        # Fallback: default pipelining if this JAX build rejects Buffered(1).
        out = build(None)(hs2, ht2, *consts)
        return jax.block_until_ready(out)


# ---------------------------------------------------------------------------
# Wrapper: fold BN, pick tiles, pad minimally, call pallas_call.
# ---------------------------------------------------------------------------
def gated_fusion(HS, HT, params, *, storage_dtype=jnp.bfloat16,
                 target_rows=512, vmem_budget_bytes=40 * (1 << 20)):
    B, T, N, D = HS.shape
    fp = fold_params(params)
    Dm = fp["wh2"].shape[1]                      # D + m
    M = B * T * N

    act_dt = jnp.dtype(storage_dtype)
    # NOTE: in production the upstream layers should hand over activations
    # already in `storage_dtype` (e.g. bf16) so these casts are no-ops.
    hs2 = HS.reshape(M, D).astype(act_dt)
    ht2 = HT.reshape(M, D).astype(act_dt)

    # Lane-dense output pad only when write amplification is <= ~12.5%.
    Dm_aligned = _round_up(Dm, 128)
    Dm_pad = Dm_aligned if (Dm_aligned - Dm) * 8 <= Dm else Dm

    wxs = fp["wxs"].astype(act_dt)
    wxt = fp["wxt"].astype(act_dt)
    wh1 = fp["wh1"].astype(act_dt)
    wh2, bh2 = fp["wh2"], fp["bh2"]
    if Dm_pad > Dm:
        wh2 = jnp.pad(wh2, ((0, 0), (0, Dm_pad - Dm)))
        bh2 = jnp.pad(bh2, ((0, 0), (0, Dm_pad - Dm)))
    wh2 = wh2.astype(act_dt)
    bg, bh1 = fp["bg"], fp["bh1"]                # biases stay f32 (added into f32 acc)

    consts = (wxs, wxt, bg, wh1, bh1, wh2, bh2)
    weight_bytes = sum(int(c.nbytes) for c in consts)

    n_tiles, tm = _choose_tiling(M, D, Dm_pad, act_dt.itemsize, weight_bytes,
                                 target_rows, vmem_budget_bytes)
    M_pad = n_tiles * tm
    if M_pad > M:
        hs2 = jnp.pad(hs2, ((0, M_pad - M), (0, 0)))
        ht2 = jnp.pad(ht2, ((0, M_pad - M), (0, 0)))

    per_step_vmem = (4 * tm * D + 2 * tm * Dm_pad) * act_dt.itemsize + 2 * weight_bytes
    vmem_limit = int(min(48 * (1 << 20), max(2 * per_step_vmem + (4 << 20), 16 << 20)))

    cost = pl.CostEstimate(
        flops=2 * M_pad * D * (3 * D + Dm_pad) + 10 * M_pad * D,
        transcendentals=M_pad * D,
        bytes_accessed=(2 * M_pad * D + M_pad * Dm_pad) * act_dt.itemsize
        + weight_bytes,
    )

    out = _pallas_forward(hs2, ht2, consts, tm=tm, n_tiles=n_tiles, D=D,
                          Dm_pad=Dm_pad, out_dtype=act_dt,
                          vmem_limit=vmem_limit, cost=cost)

    if M_pad > M:
        out = out[:M]
    if Dm_pad > Dm:
        out = out[:, :Dm]
    return out.reshape(B, T, N, Dm)


# ---------------------------------------------------------------------------
# Deterministic parameter construction.  Non-trivial BN gamma/beta/running
# stats and conv biases are used on purpose so the BN-folding algebra is
# actually exercised (the PyTorch init would be identity BN + zero biases).
# ---------------------------------------------------------------------------
def xavier_uniform(key, fan_in, fan_out):
    limit = math.sqrt(6.0 / (fan_in + fan_out))
    # stored transposed as [in, out] so the kernel does x @ W
    return jax.random.uniform(key, (fan_in, fan_out), jnp.float32, -limit, limit)


def make_params(key, D, m):
    Dm = D + m
    k = jax.random.split(key, 12)

    def bn(kk, width):
        kg, kb, km, kv = jax.random.split(kk, 4)
        return dict(
            gamma=jax.random.uniform(kg, (1, width), jnp.float32, 0.5, 1.5),
            beta=0.1 * jax.random.normal(kb, (1, width), jnp.float32),
            mean=0.1 * jax.random.normal(km, (1, width), jnp.float32),
            var=jax.random.uniform(kv, (1, width), jnp.float32, 0.5, 2.0),
        )

    def bias(kk, width):
        return 0.1 * jax.random.normal(kk, (1, width), jnp.float32)

    return dict(
        wxs=xavier_uniform(k[0], D, D), bn_xs=bn(k[1], D),
        wxt=xavier_uniform(k[2], D, D), bxt=bias(k[3], D), bn_xt=bn(k[4], D),
        wh1=xavier_uniform(k[5], D, D), bh1=bias(k[6], D), bn_h1=bn(k[7], D),
        wh2=xavier_uniform(k[8], D, Dm), bh2=bias(k[9], Dm), bn_h2=bn(k[10], Dm),
    )


# ---------------------------------------------------------------------------
# Pure-JAX reference of the same forward (unfused; eval-mode BN applied
# explicitly, so it also checks the folding algebra).
# ---------------------------------------------------------------------------
def gated_fusion_ref(HS, HT, p, eps=1e-5):
    def bn(x, b):
        return (x - b["mean"]) / jnp.sqrt(b["var"] + eps) * b["gamma"] + b["beta"]

    xs = bn(HS @ p["wxs"], p["bn_xs"])
    xt = bn(HT @ p["wxt"] + p["bxt"], p["bn_xt"])
    z = jax.nn.sigmoid(xs + xt)
    h = z * HS + (1.0 - z) * HT
    h1 = jnp.maximum(bn(h @ p["wh1"] + p["bh1"], p["bn_h1"]), 0.0)
    return bn(h1 @ p["wh2"] + p["bh2"], p["bn_h2"])


if __name__ == "__main__":
    # Small shapes consistent with gatedFusion: [batch, num_step, num_vertex, D]
    B, T, N, D, m = 2, 8, 16, 32, 8

    key = jax.random.PRNGKey(0)
    k_hs, k_ht, k_p = jax.random.split(key, 3)
    HS = jax.random.normal(k_hs, (B, T, N, D), jnp.float32)
    HT = jax.random.normal(k_ht, (B, T, N, D), jnp.float32)
    params = make_params(k_p, D, m)

    ref = gated_fusion_ref(HS, HT, params)

    # 1) f32 storage path: validates BN folding / gate fusion / tiling tightly.
    out_f32 = jax.block_until_ready(
        gated_fusion(HS, HT, params, storage_dtype=jnp.float32))
    assert out_f32.shape == (B, T, N, D + m), out_f32.shape
    assert jnp.allclose(out_f32, ref, rtol=2e-2, atol=2e-2), "f32 path mismatch"

    # 2) bf16 storage path (production / bandwidth-optimized); looser tolerance
    #    because inputs, weights, h/h1 and the output are stored in bf16.
    out_bf16 = jax.block_until_ready(
        gated_fusion(HS, HT, params, storage_dtype=jnp.bfloat16))
    assert out_bf16.shape == (B, T, N, D + m), out_bf16.shape
    assert jnp.allclose(out_bf16.astype(jnp.float32), ref, rtol=8e-2, atol=8e-2), \
        "bf16 path mismatch"

    print("KERNEL_OK")
</pallas_src>

<mosaic_0001>
module attributes {stable_mosaic.version = 11 : i64} {
  func.func @gated_fusion_kernel(%arg0: i32, %arg1: memref<128x32xf32, #tpu.memory_space<vmem>>, %arg2: memref<128x32xf32, #tpu.memory_space<vmem>>, %arg3: memref<32x32xf32, #tpu.memory_space<vmem>>, %arg4: memref<32x32xf32, #tpu.memory_space<vmem>>, %arg5: memref<1x32xf32, #tpu.memory_space<vmem>>, %arg6: memref<32x32xf32, #tpu.memory_space<vmem>>, %arg7: memref<1x32xf32, #tpu.memory_space<vmem>>, %arg8: memref<32x40xf32, #tpu.memory_space<vmem>>, %arg9: memref<1x40xf32, #tpu.memory_space<vmem>>, %arg10: memref<128x40xf32, #tpu.memory_space<vmem>>) attributes {dimension_semantics = [#tpu.dimension_semantics<parallel>], iteration_bounds = array<i64: 2>, scalar_prefetch = 0 : i64, scratch_operands = 0 : i64, tpu.core_type = #tpu.core_type<tc>, window_params = [{transform_indices = @transform_0, window_bounds = array<i64: 128, 32>}, {transform_indices = @transform_1, window_bounds = array<i64: 128, 32>}, {pipeline_mode = #tpu.pipeline_mode<synchronous>, transform_indices = @transform_2, window_bounds = array<i64: 32, 32>}, {pipeline_mode = #tpu.pipeline_mode<synchronous>, transform_indices = @transform_3, window_bounds = array<i64: 32, 32>}, {pipeline_mode = #tpu.pipeline_mode<synchronous>, transform_indices = @transform_4, window_bounds = array<i64: 1, 32>}, {pipeline_mode = #tpu.pipeline_mode<synchronous>, transform_indices = @transform_5, window_bounds = array<i64: 32, 32>}, {pipeline_mode = #tpu.pipeline_mode<synchronous>, transform_indices = @transform_6, window_bounds = array<i64: 1, 32>}, {pipeline_mode = #tpu.pipeline_mode<synchronous>, transform_indices = @transform_7, window_bounds = array<i64: 32, 40>}, {pipeline_mode = #tpu.pipeline_mode<synchronous>, transform_indices = @transform_8, window_bounds = array<i64: 1, 40>}, {transform_indices = @transform_9, window_bounds = array<i64: 128, 40>}]} {
    %c0 = arith.constant 0 : index
    %c0_0 = arith.constant 0 : index
    %0 = vector.load %arg1[%c0, %c0_0] : memref<128x32xf32, #tpu.memory_space<vmem>>, vector<128x32xf32>
    %c0_1 = arith.constant 0 : index
    %c0_2 = arith.constant 0 : index
    %1 = vector.load %arg2[%c0_1, %c0_2] : memref<128x32xf32, #tpu.memory_space<vmem>>, vector<128x32xf32>
    %c0_3 = arith.constant 0 : index
    %c0_4 = arith.constant 0 : index
    %2 = vector.load %arg3[%c0_3, %c0_4] : memref<32x32xf32, #tpu.memory_space<vmem>>, vector<32x32xf32>
    %cst = arith.constant dense<0.000000e+00> : vector<128x32xf32>
    %3 = tpu.matmul %0, %2, %cst {dimension_numbers = #tpu.dot_dimension_numbers<[1], [0], [0], [1], [0, 0, 1, 1], [], []>} : vector<128x32xf32>, vector<32x32xf32>, vector<128x32xf32> -> vector<128x32xf32>
    %c0_5 = arith.constant 0 : index
    %c0_6 = arith.constant 0 : index
    %4 = vector.load %arg4[%c0_5, %c0_6] : memref<32x32xf32, #tpu.memory_space<vmem>>, vector<32x32xf32>
    %cst_7 = arith.constant dense<0.000000e+00> : vector<128x32xf32>
    %5 = tpu.matmul %1, %4, %cst_7 {dimension_numbers = #tpu.dot_dimension_numbers<[1], [0], [0], [1], [0, 0, 1, 1], [], []>} : vector<128x32xf32>, vector<32x32xf32>, vector<128x32xf32> -> vector<128x32xf32>
    %6 = arith.addf %3, %5 : vector<128x32xf32>
    %c0_8 = arith.constant 0 : index
    %c0_9 = arith.constant 0 : index
    %7 = vector.load %arg5[%c0_8, %c0_9] : memref<1x32xf32, #tpu.memory_space<vmem>>, vector<1x32xf32>
    %8 = vector.broadcast %7 : vector<1x32xf32> to vector<128x32xf32>
    %9 = arith.addf %6, %8 : vector<128x32xf32>
    %cst_10 = arith.constant 0.000000e+00 : f32
    %10 = vector.broadcast %cst_10 : f32 to vector<128x32xf32>
    %11 = arith.subf %10, %9 : vector<128x32xf32>
    %12 = math.exp %11 : vector<128x32xf32>
    %cst_11 = arith.constant 1.000000e+00 : f32
    %13 = vector.broadcast %cst_11 : f32 to vector<128x32xf32>
    %14 = arith.addf %13, %12 : vector<128x32xf32>
    %15 = tpu.reciprocal %14 {approx = true} : vector<128x32xf32> -> vector<128x32xf32>
    %16 = arith.subf %0, %1 : vector<128x32xf32>
    %17 = arith.mulf %15, %16 : vector<128x32xf32>
    %18 = arith.addf %1, %17 : vector<128x32xf32>
    %c0_12 = arith.constant 0 : index
    %c0_13 = arith.constant 0 : index
    %19 = vector.load %arg6[%c0_12, %c0_13] : memref<32x32xf32, #tpu.memory_space<vmem>>, vector<32x32xf32>
    %cst_14 = arith.constant dense<0.000000e+00> : vector<128x32xf32>
    %20 = tpu.matmul %18, %19, %cst_14 {dimension_numbers = #tpu.dot_dimension_numbers<[1], [0], [0], [1], [0, 0, 1, 1], [], []>} : vector<128x32xf32>, vector<32x32xf32>, vector<128x32xf32> -> vector<128x32xf32>
    %c0_15 = arith.constant 0 : index
    %c0_16 = arith.constant 0 : index
    %21 = vector.load %arg7[%c0_15, %c0_16] : memref<1x32xf32, #tpu.memory_space<vmem>>, vector<1x32xf32>
    %22 = vector.broadcast %21 : vector<1x32xf32> to vector<128x32xf32>
    %23 = arith.addf %20, %22 : vector<128x32xf32>
    %cst_17 = arith.constant 0.000000e+00 : f32
    %24 = vector.broadcast %cst_17 : f32 to vector<128x32xf32>
    %25 = arith.maximumf %23, %24 : vector<128x32xf32>
    %c0_18 = arith.constant 0 : index
    %c0_19 = arith.constant 0 : index
    %26 = vector.load %arg8[%c0_18, %c0_19] : memref<32x40xf32, #tpu.memory_space<vmem>>, vector<32x40xf32>
    %cst_20 = arith.constant dense<0.000000e+00> : vector<128x40xf32>
    %27 = tpu.matmul %25, %26, %cst_20 {dimension_numbers = #tpu.dot_dimension_numbers<[1], [0], [0], [1], [0, 0, 1, 1], [], []>} : vector<128x32xf32>, vector<32x40xf32>, vector<128x40xf32> -> vector<128x40xf32>
    %c0_21 = arith.constant 0 : index
    %c0_22 = arith.constant 0 : index
    %28 = vector.load %arg9[%c0_21, %c0_22] : memref<1x40xf32, #tpu.memory_space<vmem>>, vector<1x40xf32>
    %29 = vector.broadcast %28 : vector<1x40xf32> to vector<128x40xf32>
    %30 = arith.addf %27, %29 : vector<128x40xf32>
    %c0_23 = arith.constant 0 : index
    %c0_24 = arith.constant 0 : index
    %31 = vector.load %arg10[%c0_23, %c0_24] : memref<128x40xf32, #tpu.memory_space<vmem>>, vector<128x40xf32>
    tpu.vector_store %arg10[%c0_23, %c0_24], %30 {strides = array<i32>} : memref<128x40xf32, #tpu.memory_space<vmem>>, vector<128x40xf32>,
    return
  }
  func.func @transform_0(%arg0: i32) -> (i32, i32) {
    %c0_i32 = arith.constant 0 : i32
    %c0_i32_0 = arith.constant 0 : i32
    return %arg0, %c0_i32 : i32, i32
  }
  func.func @transform_1(%arg0: i32) -> (i32, i32) {
    %c0_i32 = arith.constant 0 : i32
    %c0_i32_0 = arith.constant 0 : i32
    return %arg0, %c0_i32 : i32, i32
  }
  func.func @transform_2(%arg0: i32) -> (i32, i32) {
    %c0_i32 = arith.constant 0 : i32
    %c0_i32_0 = arith.constant 0 : i32
    %c0_i32_1 = arith.constant 0 : i32
    return %c0_i32, %c0_i32_0 : i32, i32
  }
  func.func @transform_3(%arg0: i32) -> (i32, i32) {
    %c0_i32 = arith.constant 0 : i32
    %c0_i32_0 = arith.constant 0 : i32
    %c0_i32_1 = arith.constant 0 : i32
    return %c0_i32, %c0_i32_0 : i32, i32
  }
  func.func @transform_4(%arg0: i32) -> (i32, i32) {
    %c0_i32 = arith.constant 0 : i32
    %c0_i32_0 = arith.constant 0 : i32
    %c0_i32_1 = arith.constant 0 : i32
    return %c0_i32, %c0_i32_0 : i32, i32
  }
  func.func @transform_5(%arg0: i32) -> (i32, i32) {
    %c0_i32 = arith.constant 0 : i32
    %c0_i32_0 = arith.constant 0 : i32
    %c0_i32_1 = arith.constant 0 : i32
    return %c0_i32, %c0_i32_0 : i32, i32
  }
  func.func @transform_6(%arg0: i32) -> (i32, i32) {
    %c0_i32 = arith.constant 0 : i32
    %c0_i32_0 = arith.constant 0 : i32
    %c0_i32_1 = arith.constant 0 : i32
    return %c0_i32, %c0_i32_0 : i32, i32
  }
  func.func @transform_7(%arg0: i32) -> (i32, i32) {
    %c0_i32 = arith.constant 0 : i32
    %c0_i32_0 = arith.constant 0 : i32
    %c0_i32_1 = arith.constant 0 : i32
    return %c0_i32, %c0_i32_0 : i32, i32
  }
  func.func @transform_8(%arg0: i32) -> (i32, i32) {
    %c0_i32 = arith.constant 0 : i32
    %c0_i32_0 = arith.constant 0 : i32
    %c0_i32_1 = arith.constant 0 : i32
    return %c0_i32, %c0_i32_0 : i32, i32
  }
  func.func @transform_9(%arg0: i32) -> (i32, i32) {
    %c0_i32 = arith.constant 0 : i32
    %c0_i32_0 = arith.constant 0 : i32
    return %arg0, %c0_i32 : i32, i32
  }
}

module attributes {stable_mosaic.version = 11 : i64} {
  func.func @gated_fusion_kernel(%arg0: i32, %arg1: memref<128x32xf32, #tpu.memory_space<vmem>>, %arg2: memref<128x32xf32, #tpu.memory_space<vmem>>, %arg3: memref<32x32xf32, #tpu.memory_space<vmem>>, %arg4: memref<32x32xf32, #tpu.memory_space<vmem>>, %arg5: memref<1x32xf32, #tpu.memory_space<vmem>>, %arg6: memref<32x32xf32, #tpu.memory_space<vmem>>, %arg7: memref<1x32xf32, #tpu.memory_space<vmem>>, %arg8: memref<32x40xf32, #tpu.memory_space<vmem>>, %arg9: memref<1x40xf32, #tpu.memory_space<vmem>>, %arg10: memref<128x40xf32, #tpu.memory_space<vmem>>) attributes {dimension_semantics = [#tpu.dimension_semantics<parallel>], iteration_bounds = array<i64: 2>, scalar_prefetch = 0 : i64, scratch_operands = 0 : i64, tpu.core_type = #tpu.core_type<tc>, window_params = [{transform_indices = @transform_0, window_bounds = array<i64: 128, 32>}, {transform_indices = @transform_1, window_bounds = array<i64: 128, 32>}, {pipeline_mode = #tpu.pipeline_mode<synchronous>, transform_indices = @transform_2, window_bounds = array<i64: 32, 32>}, {pipeline_mode = #tpu.pipeline_mode<synchronous>, transform_indices = @transform_3, window_bounds = array<i64: 32, 32>}, {pipeline_mode = #tpu.pipeline_mode<synchronous>, transform_indices = @transform_4, window_bounds = array<i64: 1, 32>}, {pipeline_mode = #tpu.pipeline_mode<synchronous>, transform_indices = @transform_5, window_bounds = array<i64: 32, 32>}, {pipeline_mode = #tpu.pipeline_mode<synchronous>, transform_indices = @transform_6, window_bounds = array<i64: 1, 32>}, {pipeline_mode = #tpu.pipeline_mode<synchronous>, transform_indices = @transform_7, window_bounds = array<i64: 32, 40>}, {pipeline_mode = #tpu.pipeline_mode<synchronous>, transform_indices = @transform_8, window_bounds = array<i64: 1, 40>}, {transform_indices = @transform_9, window_bounds = array<i64: 128, 40>}]} {
    %c0 = arith.constant 0 : index
    %c0_0 = arith.constant 0 : index
    %0 = vector.load %arg1[%c0, %c0_0] : memref<128x32xf32, #tpu.memory_space<vmem>>, vector<128x32xf32>
    %c0_1 = arith.constant 0 : index
    %c0_2 = arith.constant 0 : index
    %1 = vector.load %arg2[%c0_1, %c0_2] : memref<128x32xf32, #tpu.memory_space<vmem>>, vector<128x32xf32>
    %c0_3 = arith.constant 0 : index
    %c0_4 = arith.constant 0 : index
    %2 = vector.load %arg3[%c0_3, %c0_4] : memref<32x32xf32, #tpu.memory_space<vmem>>, vector<32x32xf32>
    %cst = arith.constant dense<0.000000e+00> : vector<128x32xf32>
    %3 = tpu.matmul %0, %2, %cst {dimension_numbers = #tpu.dot_dimension_numbers<[1], [0], [0], [1], [0, 0, 1, 1], [], []>} : vector<128x32xf32>, vector<32x32xf32>, vector<128x32xf32> -> vector<128x32xf32>
    %c0_5 = arith.constant 0 : index
    %c0_6 = arith.constant 0 : index
    %4 = vector.load %arg4[%c0_5, %c0_6] : memref<32x32xf32, #tpu.memory_space<vmem>>, vector<32x32xf32>
    %cst_7 = arith.constant dense<0.000000e+00> : vector<128x32xf32>
    %5 = tpu.matmul %1, %4, %cst_7 {dimension_numbers = #tpu.dot_dimension_numbers<[1], [0], [0], [1], [0, 0, 1, 1], [], []>} : vector<128x32xf32>, vector<32x32xf32>, vector<128x32xf32> -> vector<128x32xf32>
    %6 = arith.addf %3, %5 : vector<128x32xf32>
    %c0_8 = arith.constant 0 : index
    %c0_9 = arith.constant 0 : index
    %7 = vector.load %arg5[%c0_8, %c0_9] : memref<1x32xf32, #tpu.memory_space<vmem>>, vector<1x32xf32>
    %8 = vector.broadcast %7 : vector<1x32xf32> to vector<128x32xf32>
    %9 = arith.addf %6, %8 : vector<128x32xf32>
    %cst_10 = arith.constant 0.000000e+00 : f32
    %10 = vector.broadcast %cst_10 : f32 to vector<128x32xf32>
    %11 = arith.subf %10, %9 : vector<128x32xf32>
    %12 = math.exp %11 : vector<128x32xf32>
    %cst_11 = arith.constant 1.000000e+00 : f32
    %13 = vector.broadcast %cst_11 : f32 to vector<128x32xf32>
    %14 = arith.addf %13, %12 : vector<128x32xf32>
    %15 = tpu.reciprocal %14 {approx = true} : vector<128x32xf32> -> vector<128x32xf32>
    %16 = arith.subf %0, %1 : vector<128x32xf32>
    %17 = arith.mulf %15, %16 : vector<128x32xf32>
    %18 = arith.addf %1, %17 : vector<128x32xf32>
    %c0_12 = arith.constant 0 : index
    %c0_13 = arith.constant 0 : index
    %19 = vector.load %arg6[%c0_12, %c0_13] : memref<32x32xf32, #tpu.memory_space<vmem>>, vector<32x32xf32>
    %cst_14 = arith.constant dense<0.000000e+00> : vector<128x32xf32>
    %20 = tpu.matmul %18, %19, %cst_14 {dimension_numbers = #tpu.dot_dimension_numbers<[1], [0], [0], [1], [0, 0, 1, 1], [], []>} : vector<128x32xf32>, vector<32x32xf32>, vector<128x32xf32> -> vector<128x32xf32>
    %c0_15 = arith.constant 0 : index
    %c0_16 = arith.constant 0 : index
    %21 = vector.load %arg7[%c0_15, %c0_16] : memref<1x32xf32, #tpu.memory_space<vmem>>, vector<1x32xf32>
    %22 = vector.broadcast %21 : vector<1x32xf32> to vector<128x32xf32>
    %23 = arith.addf %20, %22 : vector<128x32xf32>
    %cst_17 = arith.constant 0.000000e+00 : f32
    %24 = vector.broadcast %cst_17 : f32 to vector<128x32xf32>
    %25 = arith.maximumf %23, %24 : vector<128x32xf32>
    %c0_18 = arith.constant 0 : index
    %c0_19 = arith.constant 0 : index
    %26 = vector.load %arg8[%c0_18, %c0_19] : memref<32x40xf32, #tpu.memory_space<vmem>>, vector<32x40xf32>
    %cst_20 = arith.constant dense<0.000000e+00> : vector<128x40xf32>
    %27 = tpu.matmul %25, %26, %cst_20 {dimension_numbers = #tpu.dot_dimension_numbers<[1], [0], [0], [1], [0, 0, 1, 1], [], []>} : vector<128x32xf32>, vector<32x40xf32>, vector<128x40xf32> -> vector<128x40xf32>
    %c0_21 = arith.constant 0 : index
    %c0_22 = arith.constant 0 : index
    %28 = vector.load %arg9[%c0_21, %c0_22] : memref<1x40xf32, #tpu.memory_space<vmem>>, vector<1x40xf32>
    %29 = vector.broadcast %28 : vector<1x40xf32> to vector<128x40xf32>
    %30 = arith.addf %27, %29 : vector<128x40xf32>
    %c0_23 = arith.constant 0 : index
    %c0_24 = arith.constant 0 : index
    %31 = vector.load %arg10[%c0_23, %c0_24] : memref<128x40xf32, #tpu.memory_space<vmem>>, vector<128x40xf32>
    tpu.vector_store %arg10[%c0_23, %c0_24], %30 {strides = array<i32>} : memref<128x40xf32, #tpu.memory_space<vmem>>, vector<128x40xf32>,
    return
  }
  func.func @transform_0(%arg0: i32) -> (i32, i32) {
    %c0_i32 = arith.constant 0 : i32
    %c0_i32_0 = arith.constant 0 : i32
    return %arg0, %c0_i32 : i32, i32
  }
  func.func @transform_1(%arg0: i32) -> (i32, i32) {
    %c0_i32 = arith.constant 0 : i32
    %c0_i32_0 = arith.constant 0 : i32
    return %arg0, %c0_i32 : i32, i32
  }
  func.func @transform_2(%arg0: i32) -> (i32, i32) {
    %c0_i32 = arith.constant 0 : i32
    %c0_i32_0 = arith.constant 0 : i32
    %c0_i32_1 = arith.constant 0 : i32
    return %c0_i32, %c0_i32_0 : i32, i32
  }
  func.func @transform_3(%arg0: i32) -> (i32, i32) {
    %c0_i32 = arith.constant 0 : i32
    %c0_i32_0 = arith.constant 0 : i32
    %c0_i32_1 = arith.constant 0 : i32
    return %c0_i32, %c0_i32_0 : i32, i32
  }
  func.func @transform_4(%arg0: i32) -> (i32, i32) {
    %c0_i32 = arith.constant 0 : i32
    %c0_i32_0 = arith.constant 0 : i32
    %c0_i32_1 = arith.constant 0 : i32
    return %c0_i32, %c0_i32_0 : i32, i32
  }
  func.func @transform_5(%arg0: i32) -> (i32, i32) {
    %c0_i32 = arith.constant 0 : i32
    %c0_i32_0 = arith.constant 0 : i32
    %c0_i32_1 = arith.constant 0 : i32
    return %c0_i32, %c0_i32_0 : i32, i32
  }
  func.func @transform_6(%arg0: i32) -> (i32, i32) {
    %c0_i32 = arith.constant 0 : i32
    %c0_i32_0 = arith.constant 0 : i32
    %c0_i32_1 = arith.constant 0 : i32
    return %c0_i32, %c0_i32_0 : i32, i32
  }
  func.func @transform_7(%arg0: i32) -> (i32, i32) {
    %c0_i32 = arith.constant 0 : i32
    %c0_i32_0 = arith.constant 0 : i32
    %c0_i32_1 = arith.constant 0 : i32
    return %c0_i32, %c0_i32_0 : i32, i32
  }
  func.func @transform_8(%arg0: i32) -> (i32, i32) {
    %c0_i32 = arith.constant 0 : i32
    %c0_i32_0 = arith.constant 0 : i32
    %c0_i32_1 = arith.constant 0 : i32
    return %c0_i32, %c0_i32_0 : i32, i32
  }
  func.func @transform_9(%arg0: i32) -> (i32, i32) {
    %c0_i32 = arith.constant 0 : i32
    %c0_i32_0 = arith.constant 0 : i32
    return %arg0, %c0_i32 : i32, i32
  }
}

</mosaic_0001>

<llo_original>
// kernel: tpu_custom_call.1
$region0: #{tpu_custom_call.1}
  #allocation0 [shape = 'u32[]', space=smem, size = 0x4, offset = 0x4, fixed_abs, tag = 'smem constant byte address 0x4 - core index']
  #allocation1 [shape = 'u32[72,128]{1,0:T(1,128)}', space=vmem, size = 0x9000, scoped, tag = 'internal scratch']
  %s0 = inlined_call_operand.vmem [shape: f32[256,32], index: 0, kind: input, shape index: {}]
  %s1 = inlined_call_operand.vmem [shape: f32[256,32], index: 1, kind: input, shape index: {}]
  %s2 = inlined_call_operand.vmem [shape: f32[32,32], index: 2, kind: input, shape index: {}]
  %s3 = inlined_call_operand.vmem [shape: f32[32,32], index: 3, kind: input, shape index: {}]
  %s4 = inlined_call_operand.vmem [shape: f32[1,32], index: 4, kind: input, shape index: {}]
  %s5 = inlined_call_operand.vmem [shape: f32[32,32], index: 5, kind: input, shape index: {}]
  %s6 = inlined_call_operand.vmem [shape: f32[1,32], index: 6, kind: input, shape index: {}]
  %s7 = inlined_call_operand.vmem [shape: f32[32,40], index: 7, kind: input, shape index: {}]
  %s8 = inlined_call_operand.vmem [shape: f32[1,40], index: 8, kind: input, shape index: {}]
  %s9 = inlined_call_operand.vmem [shape: f32[256,40], index: 9, kind: output, shape index: {}]
  %s10 = sld [smem:[#allocation0]]
  $region69: #{tpu_custom_call.1} parent=0
    _
  %s12 = ssub.s32 1, %s10
  %s13 = scalar_select 0, %s12, %s10
  loop: start=0, step=1, limit=4
  $region2: #{tpu_custom_call.1} parent=0 // loop_pre_header
    _
  $region3: #{tpu_custom_call.1} parent=0 // loop_header
    %s15 = sphi 0, %s19
    %p16 = scmp.ge.s32.totalorder %s15, 4
    %s25 = sphi 0, %s27
    %s28 = sphi 0, %s25
    %s29 = sphi 0, %s28
    %s45 = sphi 0, %s29
    %s51 = sphi 0, %s53
    %s54 = sphi 0, %s51
    %s55 = sphi 0, %s54
    %s71 = sphi 0, %s55
    %s75 = sphi 0, %s75
    %s77 = sphi 0, %s75
    %s78 = sphi 0, %s77
    %s92 = sphi 0, %s78
    %s96 = sphi 0, %s96
    %s98 = sphi 0, %s96
    %s99 = sphi 0, %s98
    %s113 = sphi 0, %s99
    %s117 = sphi 0, %s117
    %s119 = sphi 0, %s117
    %s120 = sphi 0, %s119
    %s134 = sphi 0, %s120
    %s138 = sphi 0, %s138
    %s140 = sphi 0, %s138
    %s141 = sphi 0, %s140
    %s155 = sphi 0, %s141
    %s159 = sphi 0, %s159
    %s161 = sphi 0, %s159
    %s162 = sphi 0, %s161
    %s176 = sphi 0, %s162
    %s180 = sphi 0, %s180
    %s182 = sphi 0, %s180
    %s183 = sphi 0, %s182
    %s197 = sphi 0, %s183
    %s201 = sphi 0, %s201
    %s203 = sphi 0, %s201
    %s204 = sphi 0, %s203
    %s218 = sphi 0, %s204
    %s224 = sphi 0, %s226
    %s227 = sphi 0, %s224
    %s228 = sphi 0, %s227
    %s244 = sphi 0, %s228
  $region4: #{tpu_custom_call.1} parent=0 // loop_header_branch
    %18 = sbr.rel (%p16) target = $region8
  $region5: #{tpu_custom_call.1} parent=0 // loop_body
    %s20 = ssub.s32 %s15, 1
    %s21 = ssub.s32 %s15, 2
    %s22 = sadd.s32 %s15, 1
    %s23 = ssub.s32 %s15, %s22
    %p24 = scmp.eq.s32.totalorder %s23, 0
    %s26 = sadd.s32 %s25, 1
    %s27 = scalar_select %p24, %s25, %s26
    %p30 = pneg %p24
    %p31 = scmp.eq.s32.totalorder %s15, 1
    %p32 = por %p30, %p31
    %p33 = scmp.ne.s32.totalorder %s25, %s28
    %p34 = scmp.eq.s32.totalorder %s15, 0
    %p35 = por %p33, %p34
    %p36 = scmp.ne.s32.totalorder %s25, %s28
    %p37 = scmp.eq.s32.totalorder %s20, 1
    %p38 = por %p36, %p37
    %p39 = scmp.ne.s32.totalorder %s28, %s29
    %p40 = scmp.eq.s32.totalorder %s20, 0
    %p41 = por %p39, %p40
    %p42 = scmp.ne.s32.totalorder %s28, %s29
    %p43 = scmp.eq.s32.totalorder %s21, 1
    %p44 = por %p42, %p43
    %p46 = scmp.ne.s32.totalorder %s29, %s45
    %p47 = scmp.eq.s32.totalorder %s21, 0
    %p48 = por %p46, %p47
    %s49 = ssub.s32 %s15, %s22
    %p50 = scmp.eq.s32.totalorder %s49, 0
    %s52 = sadd.s32 %s51, 1
    %s53 = scalar_select %p50, %s51, %s52
    %p56 = pneg %p50
    %p57 = scmp.eq.s32.totalorder %s15, 1
    %p58 = por %p56, %p57
    %p59 = scmp.ne.s32.totalorder %s51, %s54
    %p60 = scmp.eq.s32.totalorder %s15, 0
    %p61 = por %p59, %p60
    %p62 = scmp.ne.s32.totalorder %s51, %s54
    %p63 = scmp.eq.s32.totalorder %s20, 1
    %p64 = por %p62, %p63
    %p65 = scmp.ne.s32.totalorder %s54, %s55
    %p66 = scmp.eq.s32.totalorder %s20, 0
    %p67 = por %p65, %p66
    %p68 = scmp.ne.s32.totalorder %s54, %s55
    %p69 = scmp.eq.s32.totalorder %s21, 1
    %p70 = por %p68, %p69
    %p72 = scmp.ne.s32.totalorder %s55, %s71
    %p73 = scmp.eq.s32.totalorder %s21, 0
    %p74 = por %p72, %p73
    %s76 = sadd.s32 %s75, 1
    %p79 = scmp.eq.s32.totalorder %s15, 1
    %p80 = scmp.ne.s32.totalorder %s75, %s77
    %p81 = scmp.eq.s32.totalorder %s15, 0
    %p82 = por %p80, %p81
    %p83 = scmp.ne.s32.totalorder %s75, %s77
    %p84 = scmp.eq.s32.totalorder %s20, 1
    %p85 = por %p83, %p84
    %p86 = scmp.ne.s32.totalorder %s77, %s78
    %p87 = scmp.eq.s32.totalorder %s20, 0
    %p88 = por %p86, %p87
    %p89 = scmp.ne.s32.totalorder %s77, %s78
    %p90 = scmp.eq.s32.totalorder %s21, 1
    %p91 = por %p89, %p90
    %p93 = scmp.ne.s32.totalorder %s78, %s92
    %p94 = scmp.eq.s32.totalorder %s21, 0
    %p95 = por %p93, %p94
    %s97 = sadd.s32 %s96, 1
    %p100 = scmp.eq.s32.totalorder %s15, 1
    %p101 = scmp.ne.s32.totalorder %s96, %s98
    %p102 = scmp.eq.s32.totalorder %s15, 0
    %p103 = por %p101, %p102
    %p104 = scmp.ne.s32.totalorder %s96, %s98
    %p105 = scmp.eq.s32.totalorder %s20, 1
    %p106 = por %p104, %p105
    %p107 = scmp.ne.s32.totalorder %s98, %s99
    %p108 = scmp.eq.s32.totalorder %s20, 0
    %p109 = por %p107, %p108
    %p110 = scmp.ne.s32.totalorder %s98, %s99
    %p111 = scmp.eq.s32.totalorder %s21, 1
    %p112 = por %p110, %p111
    %p114 = scmp.ne.s32.totalorder %s99, %s113
    %p115 = scmp.eq.s32.totalorder %s21, 0
    %p116 = por %p114, %p115
    %s118 = sadd.s32 %s117, 1
    %p121 = scmp.eq.s32.totalorder %s15, 1
    %p122 = scmp.ne.s32.totalorder %s117, %s119
    %p123 = scmp.eq.s32.totalorder %s15, 0
    %p124 = por %p122, %p123
    %p125 = scmp.ne.s32.totalorder %s117, %s119
    %p126 = scmp.eq.s32.totalorder %s20, 1
    %p127 = por %p125, %p126
    %p128 = scmp.ne.s32.totalorder %s119, %s120
    %p129 = scmp.eq.s32.totalorder %s20, 0
    %p130 = por %p128, %p129
    %p131 = scmp.ne.s32.totalorder %s119, %s120
    %p132 = scmp.eq.s32.totalorder %s21, 1
    %p133 = por %p131, %p132
    %p135 = scmp.ne.s32.totalorder %s120, %s134
    %p136 = scmp.eq.s32.totalorder %s21, 0
    %p137 = por %p135, %p136
    %s139 = sadd.s32 %s138, 1
    %p142 = scmp.eq.s32.totalorder %s15, 1
    %p143 = scmp.ne.s32.totalorder %s138, %s140
    %p144 = scmp.eq.s32.totalorder %s15, 0
    %p145 = por %p143, %p144
    %p146 = scmp.ne.s32.totalorder %s138, %s140
    %p147 = scmp.eq.s32.totalorder %s20, 1
    %p148 = por %p146, %p147
    %p149 = scmp.ne.s32.totalorder %s140, %s141
    %p150 = scmp.eq.s32.totalorder %s20, 0
    %p151 = por %p149, %p150
    %p152 = scmp.ne.s32.totalorder %s140, %s141
    %p153 = scmp.eq.s32.totalorder %s21, 1
    %p154 = por %p152, %p153
    %p156 = scmp.ne.s32.totalorder %s141, %s155
    %p157 = scmp.eq.s32.totalorder %s21, 0
    %p158 = por %p156, %p157
    %s160 = sadd.s32 %s159, 1
    %p163 = scmp.eq.s32.totalorder %s15, 1
    %p164 = scmp.ne.s32.totalorder %s159, %s161
    %p165 = scmp.eq.s32.totalorder %s15, 0
    %p166 = por %p164, %p165
    %p167 = scmp.ne.s32.totalorder %s159, %s161
    %p168 = scmp.eq.s32.totalorder %s20, 1
    %p169 = por %p167, %p168
    %p170 = scmp.ne.s32.totalorder %s161, %s162
    %p171 = scmp.eq.s32.totalorder %s20, 0
    %p172 = por %p170, %p171
    %p173 = scmp.ne.s32.totalorder %s161, %s162
    %p174 = scmp.eq.s32.totalorder %s21, 1
    %p175 = por %p173, %p174
    %p177 = scmp.ne.s32.totalorder %s162, %s176
    %p178 = scmp.eq.s32.totalorder %s21, 0
    %p179 = por %p177, %p178
    %s181 = sadd.s32 %s180, 1
    %p184 = scmp.eq.s32.totalorder %s15, 1
    %p185 = scmp.ne.s32.totalorder %s180, %s182
    %p186 = scmp.eq.s32.totalorder %s15, 0
    %p187 = por %p185, %p186
    %p188 = scmp.ne.s32.totalorder %s180, %s182
    %p189 = scmp.eq.s32.totalorder %s20, 1
    %p190 = por %p188, %p189
    %p191 = scmp.ne.s32.totalorder %s182, %s183
    %p192 = scmp.eq.s32.totalorder %s20, 0
    %p193 = por %p191, %p192
    %p194 = scmp.ne.s32.totalorder %s182, %s183
    %p195 = scmp.eq.s32.totalorder %s21, 1
    %p196 = por %p194, %p195
    %p198 = scmp.ne.s32.totalorder %s183, %s197
    %p199 = scmp.eq.s32.totalorder %s21, 0
    %p200 = por %p198, %p199
    %s202 = sadd.s32 %s201, 1
    %p205 = scmp.eq.s32.totalorder %s15, 1
    %p206 = scmp.ne.s32.totalorder %s201, %s203
    %p207 = scmp.eq.s32.totalorder %s15, 0
    %p208 = por %p206, %p207
    %p209 = scmp.ne.s32.totalorder %s201, %s203
    %p210 = scmp.eq.s32.totalorder %s20, 1
    %p211 = por %p209, %p210
    %p212 = scmp.ne.s32.totalorder %s203, %s204
    %p213 = scmp.eq.s32.totalorder %s20, 0
    %p214 = por %p212, %p213
    %p215 = scmp.ne.s32.totalorder %s203, %s204
    %p216 = scmp.eq.s32.totalorder %s21, 1
    %p217 = por %p215, %p216
    %p219 = scmp.ne.s32.totalorder %s204, %s218
    %p220 = scmp.eq.s32.totalorder %s21, 0
    %p221 = por %p219, %p220
    %s222 = ssub.s32 %s15, %s22
    %p223 = scmp.eq.s32.totalorder %s222, 0
    %s225 = sadd.s32 %s224, 1
    %s226 = scalar_select %p223, %s224, %s225
    %p229 = pneg %p223
    %p230 = scmp.eq.s32.totalorder %s15, 1
    %p231 = por %p229, %p230
    %p232 = scmp.ne.s32.totalorder %s224, %s227
    %p233 = scmp.eq.s32.totalorder %s15, 0
    %p234 = por %p232, %p233
    %p235 = scmp.ne.s32.totalorder %s224, %s227
    %p236 = scmp.eq.s32.totalorder %s20, 1
    %p237 = por %p235, %p236
    %p238 = scmp.ne.s32.totalorder %s227, %s228
    %p239 = scmp.eq.s32.totalorder %s20, 0
    %p240 = por %p238, %p239
    %p241 = scmp.ne.s32.totalorder %s227, %s228
    %p242 = scmp.eq.s32.totalorder %s21, 1
    %p243 = por %p241, %p242
    %p245 = scmp.ne.s32.totalorder %s228, %s244
    %p246 = scmp.eq.s32.totalorder %s21, 0
    %p247 = por %p245, %p246
    %p248 = scmp.le.s32.totalorder 1, %s15
    %p249 = scmp.lt.s32.totalorder %s15, 3
    %p250 = pnand %p248, %p249
    %p251 = pneg %p250
    // Predicated region
    $region9: #{tpu_custom_call.1} parent=5 // pred_check
      _
    $region10: #{tpu_custom_call.1} parent=5 // pred_check_branch
      %253 = sbr.rel (%p250) target = $region12
    $region11: #{tpu_custom_call.1} parent=5 // pred_region
      %s254 = ssub.s32 %s15, 1
      // Predicated region
      $region13: #{tpu_custom_call.1} parent=11 // pred_check
        %p255 = pneg %p88
      $region14: #{tpu_custom_call.1} parent=11 // pred_check_branch
        %257 = sbr.rel (%p255) target = $region16
      $region15: #{tpu_custom_call.1} parent=11 // pred_region
        _
      $region16: #{tpu_custom_call.1} parent=11 // pred_fallthru
        _
      // Predicated region
      $region17: #{tpu_custom_call.1} parent=11 // pred_check
        %p258 = pneg %p109
      $region18: #{tpu_custom_call.1} parent=11 // pred_check_branch
        %260 = sbr.rel (%p258) target = $region20
      $region19: #{tpu_custom_call.1} parent=11 // pred_region
        _
      $region20: #{tpu_custom_call.1} parent=11 // pred_fallthru
        _
      // Predicated region
      $region21: #{tpu_custom_call.1} parent=11 // pred_check
        %p261 = pneg %p130
      $region22: #{tpu_custom_call.1} parent=11 // pred_check_branch
        %263 = sbr.rel (%p261) target = $region24
      $region23: #{tpu_custom_call.1} parent=11 // pred_region
        _
      $region24: #{tpu_custom_call.1} parent=11 // pred_fallthru
        _
      // Predicated region
      $region25: #{tpu_custom_call.1} parent=11 // pred_check
        %p264 = pneg %p151
      $region26: #{tpu_custom_call.1} parent=11 // pred_check_branch
        %266 = sbr.rel (%p264) target = $region28
      $region27: #{tpu_custom_call.1} parent=11 // pred_region
        _
      $region28: #{tpu_custom_call.1} parent=11 // pred_fallthru
        _
      // Predicated region
      $region29: #{tpu_custom_call.1} parent=11 // pred_check
        %p267 = pneg %p172
      $region30: #{tpu_custom_call.1} parent=11 // pred_check_branch
        %269 = sbr.rel (%p267) target = $region32
      $region31: #{tpu_custom_call.1} parent=11 // pred_region
        _
      $region32: #{tpu_custom_call.1} parent=11 // pred_fallthru
        _
      // Predicated region
      $region33: #{tpu_custom_call.1} parent=11 // pred_check
        %p270 = pneg %p193
      $region34: #{tpu_custom_call.1} parent=11 // pred_check_branch
        %272 = sbr.rel (%p270) target = $region36
      $region35: #{tpu_custom_call.1} parent=11 // pred_region
        _
      $region36: #{tpu_custom_call.1} parent=11 // pred_fallthru
        _
      // Predicated region
      $region37: #{tpu_custom_call.1} parent=11 // pred_check
        %p273 = pneg %p214
      $region38: #{tpu_custom_call.1} parent=11 // pred_check_branch
        %275 = sbr.rel (%p273) target = $region40
      $region39: #{tpu_custom_call.1} parent=11 // pred_region
        _
      $region40: #{tpu_custom_call.1} parent=11 // pred_fallthru
        _
    $region12: #{tpu_custom_call.1} parent=5 // pred_fallthru
      _
    %p276 = scmp.lt.s32.totalorder %s15, 2
    // Predicated region
    $region41: #{tpu_custom_call.1} parent=5 // pred_check
      %p277 = pneg %p276
    $region42: #{tpu_custom_call.1} parent=5 // pred_check_branch
      %279 = sbr.rel (%p277) target = $region44
    $region43: #{tpu_custom_call.1} parent=5 // pred_region
      // Predicated region
      $region45: #{tpu_custom_call.1} parent=43 // pred_check
        %p280 = pneg %p35
      $region46: #{tpu_custom_call.1} parent=43 // pred_check_branch
        %282 = sbr.rel (%p280) target = $region48
      $region47: #{tpu_custom_call.1} parent=43 // pred_region
        %s283 = smul.u32 16, %s15
        %p284 = scmp.lt.s32.totalorder %s283, 31
        %s285 = scalar_select %p284, %s283, 31
        %s286 = smul.addr %s285, 8
        %s287 = scalar_lea.vmem %s0, %s286
        %s288 = smul.u32 16, %s15
      $region48: #{tpu_custom_call.1} parent=43 // pred_fallthru
        _
      // Predicated region
      $region49: #{tpu_custom_call.1} parent=43 // pred_check
        %p289 = pneg %p61
      $region50: #{tpu_custom_call.1} parent=43 // pred_check_branch
        %291 = sbr.rel (%p289) target = $region52
      $region51: #{tpu_custom_call.1} parent=43 // pred_region
        %s292 = smul.u32 16, %s15
        %p293 = scmp.lt.s32.totalorder %s292, 31
        %s294 = scalar_select %p293, %s292, 31
        %s295 = smul.addr %s294, 8
        %s296 = scalar_lea.vmem %s1, %s295
        %s297 = smul.u32 16, %s15
      $region52: #{tpu_custom_call.1} parent=43 // pred_fallthru
        _
    $region44: #{tpu_custom_call.1} parent=5 // pred_fallthru
      _
    %p298 = scmp.le.s32.totalorder 1, %s15
    %p299 = scmp.lt.s32.totalorder %s15, 3
    %p300 = pnand %p298, %p299
    %p301 = pneg %p300
    // Predicated region
    $region53: #{tpu_custom_call.1} parent=5 // pred_check
      _
    $region54: #{tpu_custom_call.1} parent=5 // pred_check_branch
      %303 = sbr.rel (%p300) target = $region56
    $region55: #{tpu_custom_call.1} parent=5 // pred_region
      %s304 = ssub.s32 %s15, 1
      %s305 = smul.u32 16, %s20
      %p306 = scmp.lt.s32.totalorder %s305, 31
      %s307 = scalar_select %p306, %s305, 31
      %s308 = smul.addr %s307, 8
      %s309 = scalar_lea.vmem %s0, %s308
      %p310 = pneg %p41
      %p311 = pneg %p38
      %s312 = smul.u32 16, %s20
      %p313 = scmp.lt.s32.totalorder %s312, 31
      %s314 = scalar_select %p313, %s312, 31
      %s315 = smul.addr %s314, 8
      %s316 = scalar_lea.vmem %s1, %s315
      %p317 = pneg %p67
      %p318 = pneg %p64
      %p319 = pneg %p88
      %p320 = pneg %p85
      %p321 = pneg %p109
      %p322 = pneg %p106
      %p323 = pneg %p130
      %p324 = pneg %p127
      %p325 = pneg %p151
      %p326 = pneg %p148
      %p327 = pneg %p172
      %p328 = pneg %p169
      %p329 = pneg %p193
      %p330 = pneg %p190
      %p331 = pneg %p214
      %p332 = pneg %p211
      %p333 = pneg %p240
      %p334 = pneg %p237
      %s335 = smul.u32 16, %s20
      %p336 = scmp.lt.s32.totalorder %s335, 31
      %s337 = scalar_select %p336, %s335, 31
      %s338 = smul.addr %s337, 8
      %s339 = scalar_lea.vmem %s9, %s338
      %s340 = smul.u32 16, %s20
      %p341 = scmp.lt.s32.totalorder %s340, 31
      %s342 = scalar_select %p341, %s340, 31
      %s343 = smul.addr %s342, 8
      %s344 = scalar_lea.vmem %s0, %s343
      %s345 = smul.u32 16, %s20
      %s346 = smul.u32 16, %s20
      %p347 = scmp.lt.s32.totalorder %s346, 31
      %s348 = scalar_select %p347, %s346, 31
      %s349 = smul.addr %s348, 8
      %s350 = scalar_lea.vmem %s1, %s349
      %s351 = smul.u32 16, %s20
      %s352 = smul.u32 16, %s20
      %p353 = scmp.lt.s32.totalorder %s352, 31
      %s354 = scalar_select %p353, %s352, 31
      %s355 = smul.addr %s354, 8
      %s356 = scalar_lea.vmem %s9, %s355
      %s357 = smul.u32 16, %s20
      %v358 = vld [vmem:[%s344] sm:$0xff]
      %v359 = vld [vmem:[%s344 + $0x8] sm:$0xff]
      %v360 = vld [vmem:[%s344 + $0x10] sm:$0xff]
      %v361 = vld [vmem:[%s344 + $0x18] sm:$0xff]
      %v362 = vld [vmem:[%s344 + $0x20] sm:$0xff]
      %v363 = vld [vmem:[%s344 + $0x28] sm:$0xff]
      %v364 = vld [vmem:[%s344 + $0x30] sm:$0xff]
      %v365 = vld [vmem:[%s344 + $0x38] sm:$0xff]
      %v366 = vld [vmem:[%s344 + $0x40] sm:$0xff]
      %v367 = vld [vmem:[%s344 + $0x48] sm:$0xff]
      %v368 = vld [vmem:[%s344 + $0x50] sm:$0xff]
      %v369 = vld [vmem:[%s344 + $0x58] sm:$0xff]
      %v370 = vld [vmem:[%s344 + $0x60] sm:$0xff]
      %v371 = vld [vmem:[%s344 + $0x68] sm:$0xff]
      %v372 = vld [vmem:[%s344 + $0x70] sm:$0xff]
      %v373 = vld [vmem:[%s344 + $0x78] sm:$0xff]
      %v374 = vld [vmem:[%s350] sm:$0xff]
      %v375 = vld [vmem:[%s350 + $0x8] sm:$0xff]
      %v376 = vld [vmem:[%s350 + $0x10] sm:$0xff]
      %v377 = vld [vmem:[%s350 + $0x18] sm:$0xff]
      %v378 = vld [vmem:[%s350 + $0x20] sm:$0xff]
      %v379 = vld [vmem:[%s350 + $0x28] sm:$0xff]
      %v380 = vld [vmem:[%s350 + $0x30] sm:$0xff]
      %v381 = vld [vmem:[%s350 + $0x38] sm:$0xff]
      %v382 = vld [vmem:[%s350 + $0x40] sm:$0xff]
      %v383 = vld [vmem:[%s350 + $0x48] sm:$0xff]
      %v384 = vld [vmem:[%s350 + $0x50] sm:$0xff]
      %v385 = vld [vmem:[%s350 + $0x58] sm:$0xff]
      %v386 = vld [vmem:[%s350 + $0x60] sm:$0xff]
      %v387 = vld [vmem:[%s350 + $0x68] sm:$0xff]
      %v388 = vld [vmem:[%s350 + $0x70] sm:$0xff]
      %v389 = vld [vmem:[%s350 + $0x78] sm:$0xff]
      %v390 = vld [vmem:[%s2] sm:$0xff]
      %v391 = vld [vmem:[%s2 + $0x8] sm:$0xff]
      %v392 = vld [vmem:[%s2 + $0x10] sm:$0xff]
      %v393 = vld [vmem:[%s2 + $0x18] sm:$0xff]
      %v394 = vld [vmem:[%s3] sm:$0xff]
      %v395 = vld [vmem:[%s3 + $0x8] sm:$0xff]
      %v396 = vld [vmem:[%s3 + $0x10] sm:$0xff]
      %v397 = vld [vmem:[%s3 + $0x18] sm:$0xff]
      %vm398 = vcmask 261120
      %v400 = vsel %vm398, %v374, 0
      %v403 = vsel %vm398, %v375, 0
      %v406 = vsel %vm398, %v376, 0
      %v409 = vsel %vm398, %v377, 0
      %v412 = vsel %vm398, %v378, 0
      %v415 = vsel %vm398, %v379, 0
      %v418 = vsel %vm398, %v380, 0
      %v421 = vsel %vm398, %v381, 0
      %v424 = vsel %vm398, %v382, 0
      %v427 = vsel %vm398, %v383, 0
      %v430 = vsel %vm398, %v384, 0
      %v433 = vsel %vm398, %v385, 0
      %v436 = vsel %vm398, %v386, 0
      %v439 = vsel %vm398, %v387, 0
      %v442 = vsel %vm398, %v388, 0
      %v445 = vsel %vm398, %v389, 0
      %447 = vmatpush.msra.mxu0 0.0
      %448 = vmatpush.msra.mxu0 0.0
      %449 = vmatpush.msra.mxu0 0.0
      %450 = vmatpush.msra.mxu0 0.0
      %451 = vmatpush.msra.mxu0 0.0
      %452 = vmatpush.msra.mxu0 0.0
      %453 = vmatpush.msra.mxu0 0.0
      %454 = vmatpush.msra.mxu0 0.0
      %455 = vmatpush.msra.mxu0 0.0
      %456 = vmatpush.msra.mxu0 0.0
      %457 = vmatpush.msra.mxu0 0.0
      %458 = vmatpush.msra.mxu0 0.0
      %459 = vmatpush.msra.mxu0 %v397
      %460 = vmatpush.msra.mxu0 %v396
      %461 = vmatpush.msra.mxu0 %v395
      %462 = vmatpush.msra.mxu0 %v394
      %463 = vmatmul.f32.gmra.mxu0 %v400
      %v464 = vpop.f32.mrf.mxu0
      %v465 = vadd.f32 0.0, %v464
      %466 = vmatmul.f32.gmra.mxu0 %v403
      %v467 = vpop.f32.mrf.mxu0
      %v468 = vadd.f32 0.0, %v467
      %469 = vmatmul.f32.gmra.mxu0 %v406
      %v470 = vpop.f32.mrf.mxu0
      %v471 = vadd.f32 0.0, %v470
      %472 = vmatmul.f32.gmra.mxu0 %v409
      %v473 = vpop.f32.mrf.mxu0
      %v474 = vadd.f32 0.0, %v473
      %475 = vmatmul.f32.gmra.mxu0 %v412
      %v476 = vpop.f32.mrf.mxu0
      %v477 = vadd.f32 0.0, %v476
      %478 = vmatmul.f32.gmra.mxu0 %v415
      %v479 = vpop.f32.mrf.mxu0
      %v480 = vadd.f32 0.0, %v479
      %481 = vmatmul.f32.gmra.mxu0 %v418
      %v482 = vpop.f32.mrf.mxu0
      %v483 = vadd.f32 0.0, %v482
      %484 = vmatmul.f32.gmra.mxu0 %v421
      %v485 = vpop.f32.mrf.mxu0
      %v486 = vadd.f32 0.0, %v485
      %487 = vmatmul.f32.gmra.mxu0 %v424
      %v488 = vpop.f32.mrf.mxu0
      %v489 = vadd.f32 0.0, %v488
      %490 = vmatmul.f32.gmra.mxu0 %v427
      %v491 = vpop.f32.mrf.mxu0
      %v492 = vadd.f32 0.0, %v491
      %493 = vmatmul.f32.gmra.mxu0 %v430
      %v494 = vpop.f32.mrf.mxu0
      %v495 = vadd.f32 0.0, %v494
      %496 = vmatmul.f32.gmra.mxu0 %v433
      %v497 = vpop.f32.mrf.mxu0
      %v498 = vadd.f32 0.0, %v497
      %499 = vmatmul.f32.gmra.mxu0 %v436
      %v500 = vpop.f32.mrf.mxu0
      %v501 = vadd.f32 0.0, %v500
      %502 = vmatmul.f32.gmra.mxu0 %v439
      %v503 = vpop.f32.mrf.mxu0
      %v504 = vadd.f32 0.0, %v503
      %505 = vmatmul.f32.gmra.mxu0 %v442
      %v506 = vpop.f32.mrf.mxu0
      %v507 = vadd.f32 0.0, %v506
      %508 = vmatmul.f32.gmra.mxu0 %v445
      %v509 = vpop.f32.mrf.mxu0
      %v510 = vadd.f32 0.0, %v509
      %511 = vdwg.mxu0
      %v513 = vsel %vm398, %v358, 0
      %v516 = vsel %vm398, %v359, 0
      %v519 = vsel %vm398, %v360, 0
      %v522 = vsel %vm398, %v361, 0
      %v525 = vsel %vm398, %v362, 0
      %v528 = vsel %vm398, %v363, 0
      %v531 = vsel %vm398, %v364, 0
      %v534 = vsel %vm398, %v365, 0
      %v537 = vsel %vm398, %v366, 0
      %v540 = vsel %vm398, %v367, 0
      %v543 = vsel %vm398, %v368, 0
      %v546 = vsel %vm398, %v369, 0
      %v549 = vsel %vm398, %v370, 0
      %v552 = vsel %vm398, %v371, 0
      %v555 = vsel %vm398, %v372, 0
      %v558 = vsel %vm398, %v373, 0
      %560 = vmatpush.msra.mxu0 0.0
      %561 = vmatpush.msra.mxu0 0.0
      %562 = vmatpush.msra.mxu0 0.0
      %563 = vmatpush.msra.mxu0 0.0
      %564 = vmatpush.msra.mxu0 0.0
      %565 = vmatpush.msra.mxu0 0.0
      %566 = vmatpush.msra.mxu0 0.0
      %567 = vmatpush.msra.mxu0 0.0
      %568 = vmatpush.msra.mxu0 0.0
      %569 = vmatpush.msra.mxu0 0.0
      %570 = vmatpush.msra.mxu0 0.0
      %571 = vmatpush.msra.mxu0 0.0
      %572 = vmatpush.msra.mxu0 %v393
      %573 = vmatpush.msra.mxu0 %v392
      %574 = vmatpush.msra.mxu0 %v391
      %575 = vmatpush.msra.mxu0 %v390
      %576 = vmatmul.f32.gmra.mxu0 %v513
      %v577 = vpop.f32.mrf.mxu0
      %v578 = vadd.f32 %v465, %v577
      %579 = vmatmul.f32.gmra.mxu0 %v516
      %v580 = vpop.f32.mrf.mxu0
      %v581 = vadd.f32 %v468, %v580
      %582 = vmatmul.f32.gmra.mxu0 %v519
      %v583 = vpop.f32.mrf.mxu0
      %v584 = vadd.f32 %v471, %v583
      %585 = vmatmul.f32.gmra.mxu0 %v522
      %v586 = vpop.f32.mrf.mxu0
      %v587 = vadd.f32 %v474, %v586
      %588 = vmatmul.f32.gmra.mxu0 %v525
      %v589 = vpop.f32.mrf.mxu0
      %v590 = vadd.f32 %v477, %v589
      %591 = vmatmul.f32.gmra.mxu0 %v528
      %v592 = vpop.f32.mrf.mxu0
      %v593 = vadd.f32 %v480, %v592
      %594 = vmatmul.f32.gmra.mxu0 %v531
      %v595 = vpop.f32.mrf.mxu0
      %v596 = vadd.f32 %v483, %v595
      %597 = vmatmul.f32.gmra.mxu0 %v534
      %v598 = vpop.f32.mrf.mxu0
      %v599 = vadd.f32 %v486, %v598
      %600 = vmatmul.f32.gmra.mxu0 %v537
      %v601 = vpop.f32.mrf.mxu0
      %v602 = vadd.f32 %v489, %v601
      %603 = vmatmul.f32.gmra.mxu0 %v540
      %v604 = vpop.f32.mrf.mxu0
      %v605 = vadd.f32 %v492, %v604
      %606 = vmatmul.f32.gmra.mxu0 %v543
      %v607 = vpop.f32.mrf.mxu0
      %v608 = vadd.f32 %v495, %v607
      %609 = vmatmul.f32.gmra.mxu0 %v546
      %v610 = vpop.f32.mrf.mxu0
      %v611 = vadd.f32 %v498, %v610
      %612 = vmatmul.f32.gmra.mxu0 %v549
      %v613 = vpop.f32.mrf.mxu0
      %v614 = vadd.f32 %v501, %v613
      %615 = vmatmul.f32.gmra.mxu0 %v552
      %v616 = vpop.f32.mrf.mxu0
      %v617 = vadd.f32 %v504, %v616
      %618 = vmatmul.f32.gmra.mxu0 %v555
      %v619 = vpop.f32.mrf.mxu0
      %v620 = vadd.f32 %v507, %v619
      %621 = vmatmul.f32.gmra.mxu0 %v558
      %v622 = vpop.f32.mrf.mxu0
      %v623 = vadd.f32 %v510, %v622
      %624 = vdwg.mxu0
      %v625 = vld [vmem:[%s4] sm:$0x1]
      %v627 = vperm.slane %v625, 0
      %v629 = vadd.f32 %v578, %v627
      %v630 = vadd.f32 %v581, %v627
      %v631 = vadd.f32 %v584, %v627
      %v632 = vadd.f32 %v587, %v627
      %v633 = vadd.f32 %v590, %v627
      %v634 = vadd.f32 %v593, %v627
      %v635 = vadd.f32 %v596, %v627
      %v636 = vadd.f32 %v599, %v627
      %v637 = vadd.f32 %v602, %v627
      %v638 = vadd.f32 %v605, %v627
      %v639 = vadd.f32 %v608, %v627
      %v640 = vadd.f32 %v611, %v627
      %v641 = vadd.f32 %v614, %v627
      %v642 = vadd.f32 %v617, %v627
      %v643 = vadd.f32 %v620, %v627
      %v644 = vadd.f32 %v623, %v627
      %v645 = vsub.f32 0.0, %v629
      %v646 = vsub.f32 0.0, %v630
      %v647 = vsub.f32 0.0, %v631
      %v648 = vsub.f32 0.0, %v632
      %v649 = vsub.f32 0.0, %v633
      %v650 = vsub.f32 0.0, %v634
      %v651 = vsub.f32 0.0, %v635
      %v652 = vsub.f32 0.0, %v636
      %v653 = vsub.f32 0.0, %v637
      %v654 = vsub.f32 0.0, %v638
      %v655 = vsub.f32 0.0, %v639
      %v656 = vsub.f32 0.0, %v640
      %v657 = vsub.f32 0.0, %v641
      %v658 = vsub.f32 0.0, %v642
      %v659 = vsub.f32 0.0, %v643
      %v660 = vsub.f32 0.0, %v644
      %v661 = vmul.f32 %v645, 1.442695
      %v662 = vpow.pop %v661
      %v663 = vmul.f32 %v646, 1.442695
      %v664 = vpow.pop %v663
      %v665 = vmul.f32 %v647, 1.442695
      %v666 = vpow.pop %v665
      %v667 = vmul.f32 %v648, 1.442695
      %v668 = vpow.pop %v667
      %v669 = vmul.f32 %v649, 1.442695
      %v670 = vpow.pop %v669
      %v671 = vmul.f32 %v650, 1.442695
      %v672 = vpow.pop %v671
      %v673 = vmul.f32 %v651, 1.442695
      %v674 = vpow.pop %v673
      %v675 = vmul.f32 %v652, 1.442695
      %v676 = vpow.pop %v675
      %v677 = vmul.f32 %v653, 1.442695
      %v678 = vpow.pop %v677
      %v679 = vmul.f32 %v654, 1.442695
      %v680 = vpow.pop %v679
      %v681 = vmul.f32 %v655, 1.442695
      %v682 = vpow.pop %v681
      %v683 = vmul.f32 %v656, 1.442695
      %v684 = vpow.pop %v683
      %v685 = vmul.f32 %v657, 1.442695
      %v686 = vpow.pop %v685
      %v687 = vmul.f32 %v658, 1.442695
      %v688 = vpow.pop %v687
      %v689 = vmul.f32 %v659, 1.442695
      %v690 = vpow.pop %v689
      %v691 = vmul.f32 %v660, 1.442695
      %v692 = vpow.pop %v691
      %v693 = vadd.f32 %v662, 1.0
      %v694 = vadd.f32 %v664, 1.0
      %v695 = vadd.f32 %v666, 1.0
      %v696 = vadd.f32 %v668, 1.0
      %v697 = vadd.f32 %v670, 1.0
      %v698 = vadd.f32 %v672, 1.0
      %v699 = vadd.f32 %v674, 1.0
      %v700 = vadd.f32 %v676, 1.0
      %v701 = vadd.f32 %v678, 1.0
      %v702 = vadd.f32 %v680, 1.0
      %v703 = vadd.f32 %v682, 1.0
      %v704 = vadd.f32 %v684, 1.0
      %v705 = vadd.f32 %v686, 1.0
      %v706 = vadd.f32 %v688, 1.0
      %v707 = vadd.f32 %v690, 1.0
      %v708 = vadd.f32 %v692, 1.0
      %v709 = vrcp.pop %v693
      %v710 = vrcp.pop %v694
      %v711 = vrcp.pop %v695
      %v712 = vrcp.pop %v696
      %v713 = vrcp.pop %v697
      %v714 = vrcp.pop %v698
      %v715 = vrcp.pop %v699
      %v716 = vrcp.pop %v700
      %v717 = vrcp.pop %v701
      %v718 = vrcp.pop %v702
      %v719 = vrcp.pop %v703
      %v720 = vrcp.pop %v704
      %v721 = vrcp.pop %v705
      %v722 = vrcp.pop %v706
      %v723 = vrcp.pop %v707
      %v724 = vrcp.pop %v708
      %v725 = vsub.f32 %v358, %v374
      %v726 = vsub.f32 %v359, %v375
      %v727 = vsub.f32 %v360, %v376
      %v728 = vsub.f32 %v361, %v377
      %v729 = vsub.f32 %v362, %v378
      %v730 = vsub.f32 %v363, %v379
      %v731 = vsub.f32 %v364, %v380
      %v732 = vsub.f32 %v365, %v381
      %v733 = vsub.f32 %v366, %v382
      %v734 = vsub.f32 %v367, %v383
      %v735 = vsub.f32 %v368, %v384
      %v736 = vsub.f32 %v369, %v385
      %v737 = vsub.f32 %v370, %v386
      %v738 = vsub.f32 %v371, %v387
      %v739 = vsub.f32 %v372, %v388
      %v740 = vsub.f32 %v373, %v389
      %v741 = vmul.f32 %v709, %v725
      %v742 = vmul.f32 %v710, %v726
      %v743 = vmul.f32 %v711, %v727
      %v744 = vmul.f32 %v712, %v728
      %v745 = vmul.f32 %v713, %v729
      %v746 = vmul.f32 %v714, %v730
      %v747 = vmul.f32 %v715, %v731
      %v748 = vmul.f32 %v716, %v732
      %v749 = vmul.f32 %v717, %v733
      %v750 = vmul.f32 %v718, %v734
      %v751 = vmul.f32 %v719, %v735
      %v752 = vmul.f32 %v720, %v736
      %v753 = vmul.f32 %v721, %v737
      %v754 = vmul.f32 %v722, %v738
      %v755 = vmul.f32 %v723, %v739
      %v756 = vmul.f32 %v724, %v740
      %v757 = vadd.f32 %v374, %v741
      %v758 = vadd.f32 %v375, %v742
      %v759 = vadd.f32 %v376, %v743
      %v760 = vadd.f32 %v377, %v744
      %v761 = vadd.f32 %v378, %v745
      %v762 = vadd.f32 %v379, %v746
      %v763 = vadd.f32 %v380, %v747
      %v764 = vadd.f32 %v381, %v748
      %v765 = vadd.f32 %v382, %v749
      %v766 = vadd.f32 %v383, %v750
      %v767 = vadd.f32 %v384, %v751
      %v768 = vadd.f32 %v385, %v752
      %v769 = vadd.f32 %v386, %v753
      %v770 = vadd.f32 %v387, %v754
      %v771 = vadd.f32 %v388, %v755
      %v772 = vadd.f32 %v389, %v756
      %v773 = vld [vmem:[%s5] sm:$0xff]
      %v774 = vld [vmem:[%s5 + $0x8] sm:$0xff]
      %v775 = vld [vmem:[%s5 + $0x10] sm:$0xff]
      %v776 = vld [vmem:[%s5 + $0x18] sm:$0xff]
      %v777 = vld [vmem:[%s6] sm:$0x1]
      %v779 = vperm.slane %v777, 0
      %v782 = vsel %vm398, %v757, 0
      %v785 = vsel %vm398, %v758, 0
      %v788 = vsel %vm398, %v759, 0
      %v791 = vsel %vm398, %v760, 0
      %v794 = vsel %vm398, %v761, 0
      %v797 = vsel %vm398, %v762, 0
      %v800 = vsel %vm398, %v763, 0
      %v803 = vsel %vm398, %v764, 0
      %v806 = vsel %vm398, %v765, 0
      %v809 = vsel %vm398, %v766, 0
      %v812 = vsel %vm398, %v767, 0
      %v815 = vsel %vm398, %v768, 0
      %v818 = vsel %vm398, %v769, 0
      %v821 = vsel %vm398, %v770, 0
      %v824 = vsel %vm398, %v771, 0
      %v827 = vsel %vm398, %v772, 0
      %829 = vmatpush.msra.mxu0 0.0
      %830 = vmatpush.msra.mxu0 0.0
      %831 = vmatpush.msra.mxu0 0.0
      %832 = vmatpush.msra.mxu0 0.0
      %833 = vmatpush.msra.mxu0 0.0
      %834 = vmatpush.msra.mxu0 0.0
      %835 = vmatpush.msra.mxu0 0.0
      %836 = vmatpush.msra.mxu0 0.0
      %837 = vmatpush.msra.mxu0 0.0
      %838 = vmatpush.msra.mxu0 0.0
      %839 = vmatpush.msra.mxu0 0.0
      %840 = vmatpush.msra.mxu0 0.0
      %841 = vmatpush.msra.mxu0 %v776
      %842 = vmatpush.msra.mxu0 %v775
      %843 = vmatpush.msra.mxu0 %v774
      %844 = vmatpush.msra.mxu0 %v773
      %845 = vmatmul.f32.gmra.mxu0 %v782
      %v846 = vpop.f32.mrf.mxu0
      %v847 = vadd.f32 %v779, %v846
      %848 = vmatmul.f32.gmra.mxu0 %v785
      %v849 = vpop.f32.mrf.mxu0
      %v850 = vadd.f32 %v779, %v849
      %851 = vmatmul.f32.gmra.mxu0 %v788
      %v852 = vpop.f32.mrf.mxu0
      %v853 = vadd.f32 %v779, %v852
      %854 = vmatmul.f32.gmra.mxu0 %v791
      %v855 = vpop.f32.mrf.mxu0
      %v856 = vadd.f32 %v779, %v855
      %857 = vmatmul.f32.gmra.mxu0 %v794
      %v858 = vpop.f32.mrf.mxu0
      %v859 = vadd.f32 %v779, %v858
      %860 = vmatmul.f32.gmra.mxu0 %v797
      %v861 = vpop.f32.mrf.mxu0
      %v862 = vadd.f32 %v779, %v861
      %863 = vmatmul.f32.gmra.mxu0 %v800
      %v864 = vpop.f32.mrf.mxu0
      %v865 = vadd.f32 %v779, %v864
      %866 = vmatmul.f32.gmra.mxu0 %v803
      %v867 = vpop.f32.mrf.mxu0
      %v868 = vadd.f32 %v779, %v867
      %869 = vmatmul.f32.gmra.mxu0 %v806
      %v870 = vpop.f32.mrf.mxu0
      %v871 = vadd.f32 %v779, %v870
      %872 = vmatmul.f32.gmra.mxu0 %v809
      %v873 = vpop.f32.mrf.mxu0
      %v874 = vadd.f32 %v779, %v873
      %875 = vmatmul.f32.gmra.mxu0 %v812
      %v876 = vpop.f32.mrf.mxu0
      %v877 = vadd.f32 %v779, %v876
      %878 = vmatmul.f32.gmra.mxu0 %v815
      %v879 = vpop.f32.mrf.mxu0
      %v880 = vadd.f32 %v779, %v879
      %881 = vmatmul.f32.gmra.mxu0 %v818
      %v882 = vpop.f32.mrf.mxu0
      %v883 = vadd.f32 %v779, %v882
      %884 = vmatmul.f32.gmra.mxu0 %v821
      %v885 = vpop.f32.mrf.mxu0
      %v886 = vadd.f32 %v779, %v885
      %887 = vmatmul.f32.gmra.mxu0 %v824
      %v888 = vpop.f32.mrf.mxu0
      %v889 = vadd.f32 %v779, %v888
      %890 = vmatmul.f32.gmra.mxu0 %v827
      %v891 = vpop.f32.mrf.mxu0
      %v892 = vadd.f32 %v779, %v891
      %893 = vdwg.mxu0
      %v894 = vmax.f32 %v847, 0.0
      %v895 = vmax.f32 %v850, 0.0
      %v896 = vmax.f32 %v853, 0.0
      %v897 = vmax.f32 %v856, 0.0
      %v898 = vmax.f32 %v859, 0.0
      %v899 = vmax.f32 %v862, 0.0
      %v900 = vmax.f32 %v865, 0.0
      %v901 = vmax.f32 %v868, 0.0
      %v902 = vmax.f32 %v871, 0.0
      %v903 = vmax.f32 %v874, 0.0
      %v904 = vmax.f32 %v877, 0.0
      %v905 = vmax.f32 %v880, 0.0
      %v906 = vmax.f32 %v883, 0.0
      %v907 = vmax.f32 %v886, 0.0
      %v908 = vmax.f32 %v889, 0.0
      %v909 = vmax.f32 %v892, 0.0
      %v910 = vld [vmem:[%s7] sm:$0xff]
      %v911 = vld [vmem:[%s7 + $0x8] sm:$0xff]
      %v912 = vld [vmem:[%s7 + $0x10] sm:$0xff]
      %v913 = vld [vmem:[%s7 + $0x18] sm:$0xff]
      %v914 = vld [vmem:[%s8] sm:$0x1]
      %v916 = vperm.slane %v914, 0
      %v919 = vsel %vm398, %v894, 0
      %v922 = vsel %vm398, %v895, 0
      %v925 = vsel %vm398, %v896, 0
      %v928 = vsel %vm398, %v897, 0
      %v931 = vsel %vm398, %v898, 0
      %v934 = vsel %vm398, %v899, 0
      %v937 = vsel %vm398, %v900, 0
      %v940 = vsel %vm398, %v901, 0
      %v943 = vsel %vm398, %v902, 0
      %v946 = vsel %vm398, %v903, 0
      %v949 = vsel %vm398, %v904, 0
      %v952 = vsel %vm398, %v905, 0
      %v955 = vsel %vm398, %v906, 0
      %v958 = vsel %vm398, %v907, 0
      %v961 = vsel %vm398, %v908, 0
      %v964 = vsel %vm398, %v909, 0
      %966 = vmatpush.msra.mxu0 0.0
      %967 = vmatpush.msra.mxu0 0.0
      %968 = vmatpush.msra.mxu0 0.0
      %969 = vmatpush.msra.mxu0 0.0
      %970 = vmatpush.msra.mxu0 0.0
      %971 = vmatpush.msra.mxu0 0.0
      %972 = vmatpush.msra.mxu0 0.0
      %973 = vmatpush.msra.mxu0 0.0
      %974 = vmatpush.msra.mxu0 0.0
      %975 = vmatpush.msra.mxu0 0.0
      %976 = vmatpush.msra.mxu0 0.0
      %977 = vmatpush.msra.mxu0 0.0
      %978 = vmatpush.msra.mxu0 %v913
      %979 = vmatpush.msra.mxu0 %v912
      %980 = vmatpush.msra.mxu0 %v911
      %981 = vmatpush.msra.mxu0 %v910
      %982 = vmatmul.f32.gmra.mxu0 %v919
      %v983 = vpop.f32.mrf.mxu0
      %v984 = vadd.f32 %v916, %v983
      %985 = vmatmul.f32.gmra.mxu0 %v922
      %v986 = vpop.f32.mrf.mxu0
      %v987 = vadd.f32 %v916, %v986
      %988 = vmatmul.f32.gmra.mxu0 %v925
      %v989 = vpop.f32.mrf.mxu0
      %v990 = vadd.f32 %v916, %v989
      %991 = vmatmul.f32.gmra.mxu0 %v928
      %v992 = vpop.f32.mrf.mxu0
      %v993 = vadd.f32 %v916, %v992
      %994 = vmatmul.f32.gmra.mxu0 %v931
      %v995 = vpop.f32.mrf.mxu0
      %v996 = vadd.f32 %v916, %v995
      %997 = vmatmul.f32.gmra.mxu0 %v934
      %v998 = vpop.f32.mrf.mxu0
      %v999 = vadd.f32 %v916, %v998
      %1000 = vmatmul.f32.gmra.mxu0 %v937
      %v1001 = vpop.f32.mrf.mxu0
      %v1002 = vadd.f32 %v916, %v1001
      %1003 = vmatmul.f32.gmra.mxu0 %v940
      %v1004 = vpop.f32.mrf.mxu0
      %v1005 = vadd.f32 %v916, %v1004
      %1006 = vmatmul.f32.gmra.mxu0 %v943
      %v1007 = vpop.f32.mrf.mxu0
      %v1008 = vadd.f32 %v916, %v1007
      %1009 = vmatmul.f32.gmra.mxu0 %v946
      %v1010 = vpop.f32.mrf.mxu0
      %v1011 = vadd.f32 %v916, %v1010
      %1012 = vmatmul.f32.gmra.mxu0 %v949
      %v1013 = vpop.f32.mrf.mxu0
      %v1014 = vadd.f32 %v916, %v1013
      %1015 = vmatmul.f32.gmra.mxu0 %v952
      %v1016 = vpop.f32.mrf.mxu0
      %v1017 = vadd.f32 %v916, %v1016
      %1018 = vmatmul.f32.gmra.mxu0 %v955
      %v1019 = vpop.f32.mrf.mxu0
      %v1020 = vadd.f32 %v916, %v1019
      %1021 = vmatmul.f32.gmra.mxu0 %v958
      %v1022 = vpop.f32.mrf.mxu0
      %v1023 = vadd.f32 %v916, %v1022
      %1024 = vmatmul.f32.gmra.mxu0 %v961
      %v1025 = vpop.f32.mrf.mxu0
      %v1026 = vadd.f32 %v916, %v1025
      %1027 = vmatmul.f32.gmra.mxu0 %v964
      %v1028 = vpop.f32.mrf.mxu0
      %v1029 = vadd.f32 %v916, %v1028
      %1030 = vdwg.mxu0
      %vm1031 = vcmask 326656
      %1032 = vst.msk [vmem:[%s356] sm:$0xff] %vm1031, %v984
      %1033 = vst.msk [vmem:[%s356 + $0x8] sm:$0xff] %vm1031, %v987
      %1034 = vst.msk [vmem:[%s356 + $0x10] sm:$0xff] %vm1031, %v990
      %1035 = vst.msk [vmem:[%s356 + $0x18] sm:$0xff] %vm1031, %v993
      %1036 = vst.msk [vmem:[%s356 + $0x20] sm:$0xff] %vm1031, %v996
      %1037 = vst.msk [vmem:[%s356 + $0x28] sm:$0xff] %vm1031, %v999
      %1038 = vst.msk [vmem:[%s356 + $0x30] sm:$0xff] %vm1031, %v1002
      %1039 = vst.msk [vmem:[%s356 + $0x38] sm:$0xff] %vm1031, %v1005
      %1040 = vst.msk [vmem:[%s356 + $0x40] sm:$0xff] %vm1031, %v1008
      %1041 = vst.msk [vmem:[%s356 + $0x48] sm:$0xff] %vm1031, %v1011
      %1042 = vst.msk [vmem:[%s356 + $0x50] sm:$0xff] %vm1031, %v1014
      %1043 = vst.msk [vmem:[%s356 + $0x58] sm:$0xff] %vm1031, %v1017
      %1044 = vst.msk [vmem:[%s356 + $0x60] sm:$0xff] %vm1031, %v1020
      %1045 = vst.msk [vmem:[%s356 + $0x68] sm:$0xff] %vm1031, %v1023
      %1046 = vst.msk [vmem:[%s356 + $0x70] sm:$0xff] %vm1031, %v1026
      %1047 = vst.msk [vmem:[%s356 + $0x78] sm:$0xff] %vm1031, %v1029
      %s1048 = smul.u32 16, %s20
      %p1049 = scmp.lt.s32.totalorder %s1048, 31
      %s1050 = scalar_select %p1049, %s1048, 31
      %s1051 = smul.addr %s1050, 8
      %s1052 = scalar_lea.vmem %s9, %s1051
      // Predicated region
      $region57: #{tpu_custom_call.1} parent=55 // pred_check
        %p1053 = pneg %p237
      $region58: #{tpu_custom_call.1} parent=55 // pred_check_branch
        %1055 = sbr.rel (%p1053) target = $region60
      $region59: #{tpu_custom_call.1} parent=55 // pred_region
        %s1056 = smul.u32 16, %s20
      $region60: #{tpu_custom_call.1} parent=55 // pred_fallthru
        _
    $region56: #{tpu_custom_call.1} parent=5 // pred_fallthru
      _
    %p1057 = scmp.le.s32.totalorder 2, %s15
    // Predicated region
    $region61: #{tpu_custom_call.1} parent=5 // pred_check
      %p1058 = pneg %p1057
    $region62: #{tpu_custom_call.1} parent=5 // pred_check_branch
      %1060 = sbr.rel (%p1058) target = $region64
    $region63: #{tpu_custom_call.1} parent=5 // pred_region
      %s1061 = ssub.s32 %s15, 2
      // Predicated region
      $region65: #{tpu_custom_call.1} parent=63 // pred_check
        %p1062 = pneg %p243
      $region66: #{tpu_custom_call.1} parent=63 // pred_check_branch
        %1064 = sbr.rel (%p1062) target = $region68
      $region67: #{tpu_custom_call.1} parent=63 // pred_region
        %s1065 = smul.u32 16, %s21
        %p1066 = scmp.lt.s32.totalorder %s1065, 31
        %s1067 = scalar_select %p1066, %s1065, 31
        %s1068 = smul.addr %s1067, 8
        %s1069 = scalar_lea.vmem %s9, %s1068
      $region68: #{tpu_custom_call.1} parent=63 // pred_fallthru
        _
    $region64: #{tpu_custom_call.1} parent=5 // pred_fallthru
      _
  $region6: #{tpu_custom_call.1} parent=0 // loop_footer
    %s19 = sadd.s32 1, %s15
  $region7: #{tpu_custom_call.1} parent=0 // loop_footer_branch
    %14 = sbr.rel target = $region3
  $region8: #{tpu_custom_call.1} parent=0 // loop_exit
    _

// kernel: tpu_custom_call.1
$region0: #{tpu_custom_call.1}
  #allocation0 [shape = 'u32[]', space=smem, size = 0x4, offset = 0x4, fixed_abs, tag = 'smem constant byte address 0x4 - core index']
  #allocation1 [shape = 'u32[72,128]{1,0:T(1,128)}', space=vmem, size = 0x9000, scoped, tag = 'internal scratch']
  %s0 = inlined_call_operand.vmem [shape: f32[256,32], index: 0, kind: input, shape index: {}]
  %s1 = inlined_call_operand.vmem [shape: f32[256,32], index: 1, kind: input, shape index: {}]
  %s2 = inlined_call_operand.vmem [shape: f32[32,32], index: 2, kind: input, shape index: {}]
  %s3 = inlined_call_operand.vmem [shape: f32[32,32], index: 3, kind: input, shape index: {}]
  %s4 = inlined_call_operand.vmem [shape: f32[1,32], index: 4, kind: input, shape index: {}]
  %s5 = inlined_call_operand.vmem [shape: f32[32,32], index: 5, kind: input, shape index: {}]
  %s6 = inlined_call_operand.vmem [shape: f32[1,32], index: 6, kind: input, shape index: {}]
  %s7 = inlined_call_operand.vmem [shape: f32[32,40], index: 7, kind: input, shape index: {}]
  %s8 = inlined_call_operand.vmem [shape: f32[1,40], index: 8, kind: input, shape index: {}]
  %s9 = inlined_call_operand.vmem [shape: f32[256,40], index: 9, kind: output, shape index: {}]
  %s10 = sld [smem:[#allocation0]]
  $region69: #{tpu_custom_call.1} parent=0
    _
  %s12 = ssub.s32 1, %s10
  %s13 = scalar_select 0, %s12, %s10
  loop: start=0, step=1, limit=4
  $region2: #{tpu_custom_call.1} parent=0 // loop_pre_header
    _
  $region3: #{tpu_custom_call.1} parent=0 // loop_header
    %s15 = sphi 0, %s19
    %p16 = scmp.ge.s32.totalorder %s15, 4
    %s25 = sphi 0, %s27
    %s28 = sphi 0, %s25
    %s29 = sphi 0, %s28
    %s45 = sphi 0, %s29
    %s51 = sphi 0, %s53
    %s54 = sphi 0, %s51
    %s55 = sphi 0, %s54
    %s71 = sphi 0, %s55
    %s75 = sphi 0, %s75
    %s77 = sphi 0, %s75
    %s78 = sphi 0, %s77
    %s92 = sphi 0, %s78
    %s96 = sphi 0, %s96
    %s98 = sphi 0, %s96
    %s99 = sphi 0, %s98
    %s113 = sphi 0, %s99
    %s117 = sphi 0, %s117
    %s119 = sphi 0, %s117
    %s120 = sphi 0, %s119
    %s134 = sphi 0, %s120
    %s138 = sphi 0, %s138
    %s140 = sphi 0, %s138
    %s141 = sphi 0, %s140
    %s155 = sphi 0, %s141
    %s159 = sphi 0, %s159
    %s161 = sphi 0, %s159
    %s162 = sphi 0, %s161
    %s176 = sphi 0, %s162
    %s180 = sphi 0, %s180
    %s182 = sphi 0, %s180
    %s183 = sphi 0, %s182
    %s197 = sphi 0, %s183
    %s201 = sphi 0, %s201
    %s203 = sphi 0, %s201
    %s204 = sphi 0, %s203
    %s218 = sphi 0, %s204
    %s224 = sphi 0, %s226
    %s227 = sphi 0, %s224
    %s228 = sphi 0, %s227
    %s244 = sphi 0, %s228
  $region4: #{tpu_custom_call.1} parent=0 // loop_header_branch
    %18 = sbr.rel (%p16) target = $region8
  $region5: #{tpu_custom_call.1} parent=0 // loop_body
    %s20 = ssub.s32 %s15, 1
    %s21 = ssub.s32 %s15, 2
    %s22 = sadd.s32 %s15, 1
    %s23 = ssub.s32 %s15, %s22
    %p24 = scmp.eq.s32.totalorder %s23, 0
    %s26 = sadd.s32 %s25, 1
    %s27 = scalar_select %p24, %s25, %s26
    %p30 = pneg %p24
    %p31 = scmp.eq.s32.totalorder %s15, 1
    %p32 = por %p30, %p31
    %p33 = scmp.ne.s32.totalorder %s25, %s28
    %p34 = scmp.eq.s32.totalorder %s15, 0
    %p35 = por %p33, %p34
    %p36 = scmp.ne.s32.totalorder %s25, %s28
    %p37 = scmp.eq.s32.totalorder %s20, 1
    %p38 = por %p36, %p37
    %p39 = scmp.ne.s32.totalorder %s28, %s29
    %p40 = scmp.eq.s32.totalorder %s20, 0
    %p41 = por %p39, %p40
    %p42 = scmp.ne.s32.totalorder %s28, %s29
    %p43 = scmp.eq.s32.totalorder %s21, 1
    %p44 = por %p42, %p43
    %p46 = scmp.ne.s32.totalorder %s29, %s45
    %p47 = scmp.eq.s32.totalorder %s21, 0
    %p48 = por %p46, %p47
    %s49 = ssub.s32 %s15, %s22
    %p50 = scmp.eq.s32.totalorder %s49, 0
    %s52 = sadd.s32 %s51, 1
    %s53 = scalar_select %p50, %s51, %s52
    %p56 = pneg %p50
    %p57 = scmp.eq.s32.totalorder %s15, 1
    %p58 = por %p56, %p57
    %p59 = scmp.ne.s32.totalorder %s51, %s54
    %p60 = scmp.eq.s32.totalorder %s15, 0
    %p61 = por %p59, %p60
    %p62 = scmp.ne.s32.totalorder %s51, %s54
    %p63 = scmp.eq.s32.totalorder %s20, 1
    %p64 = por %p62, %p63
    %p65 = scmp.ne.s32.totalorder %s54, %s55
    %p66 = scmp.eq.s32.totalorder %s20, 0
    %p67 = por %p65, %p66
    %p68 = scmp.ne.s32.totalorder %s54, %s55
    %p69 = scmp.eq.s32.totalorder %s21, 1
    %p70 = por %p68, %p69
    %p72 = scmp.ne.s32.totalorder %s55, %s71
    %p73 = scmp.eq.s32.totalorder %s21, 0
    %p74 = por %p72, %p73
    %s76 = sadd.s32 %s75, 1
    %p79 = scmp.eq.s32.totalorder %s15, 1
    %p80 = scmp.ne.s32.totalorder %s75, %s77
    %p81 = scmp.eq.s32.totalorder %s15, 0
    %p82 = por %p80, %p81
    %p83 = scmp.ne.s32.totalorder %s75, %s77
    %p84 = scmp.eq.s32.totalorder %s20, 1
    %p85 = por %p83, %p84
    %p86 = scmp.ne.s32.totalorder %s77, %s78
    %p87 = scmp.eq.s32.totalorder %s20, 0
    %p88 = por %p86, %p87
    %p89 = scmp.ne.s32.totalorder %s77, %s78
    %p90 = scmp.eq.s32.totalorder %s21, 1
    %p91 = por %p89, %p90
    %p93 = scmp.ne.s32.totalorder %s78, %s92
    %p94 = scmp.eq.s32.totalorder %s21, 0
    %p95 = por %p93, %p94
    %s97 = sadd.s32 %s96, 1
    %p100 = scmp.eq.s32.totalorder %s15, 1
    %p101 = scmp.ne.s32.totalorder %s96, %s98
    %p102 = scmp.eq.s32.totalorder %s15, 0
    %p103 = por %p101, %p102
    %p104 = scmp.ne.s32.totalorder %s96, %s98
    %p105 = scmp.eq.s32.totalorder %s20, 1
    %p106 = por %p104, %p105
    %p107 = scmp.ne.s32.totalorder %s98, %s99
    %p108 = scmp.eq.s32.totalorder %s20, 0
    %p109 = por %p107, %p108
    %p110 = scmp.ne.s32.totalorder %s98, %s99
    %p111 = scmp.eq.s32.totalorder %s21, 1
    %p112 = por %p110, %p111
    %p114 = scmp.ne.s32.totalorder %s99, %s113
    %p115 = scmp.eq.s32.totalorder %s21, 0
    %p116 = por %p114, %p115
    %s118 = sadd.s32 %s117, 1
    %p121 = scmp.eq.s32.totalorder %s15, 1
    %p122 = scmp.ne.s32.totalorder %s117, %s119
    %p123 = scmp.eq.s32.totalorder %s15, 0
    %p124 = por %p122, %p123
    %p125 = scmp.ne.s32.totalorder %s117, %s119
    %p126 = scmp.eq.s32.totalorder %s20, 1
    %p127 = por %p125, %p126
    %p128 = scmp.ne.s32.totalorder %s119, %s120
    %p129 = scmp.eq.s32.totalorder %s20, 0
    %p130 = por %p128, %p129
    %p131 = scmp.ne.s32.totalorder %s119, %s120
    %p132 = scmp.eq.s32.totalorder %s21, 1
    %p133 = por %p131, %p132
    %p135 = scmp.ne.s32.totalorder %s120, %s134
    %p136 = scmp.eq.s32.totalorder %s21, 0
    %p137 = por %p135, %p136
    %s139 = sadd.s32 %s138, 1
    %p142 = scmp.eq.s32.totalorder %s15, 1
    %p143 = scmp.ne.s32.totalorder %s138, %s140
    %p144 = scmp.eq.s32.totalorder %s15, 0
    %p145 = por %p143, %p144
    %p146 = scmp.ne.s32.totalorder %s138, %s140
    %p147 = scmp.eq.s32.totalorder %s20, 1
    %p148 = por %p146, %p147
    %p149 = scmp.ne.s32.totalorder %s140, %s141
    %p150 = scmp.eq.s32.totalorder %s20, 0
    %p151 = por %p149, %p150
    %p152 = scmp.ne.s32.totalorder %s140, %s141
    %p153 = scmp.eq.s32.totalorder %s21, 1
    %p154 = por %p152, %p153
    %p156 = scmp.ne.s32.totalorder %s141, %s155
    %p157 = scmp.eq.s32.totalorder %s21, 0
    %p158 = por %p156, %p157
    %s160 = sadd.s32 %s159, 1
    %p163 = scmp.eq.s32.totalorder %s15, 1
    %p164 = scmp.ne.s32.totalorder %s159, %s161
    %p165 = scmp.eq.s32.totalorder %s15, 0
    %p166 = por %p164, %p165
    %p167 = scmp.ne.s32.totalorder %s159, %s161
    %p168 = scmp.eq.s32.totalorder %s20, 1
    %p169 = por %p167, %p168
    %p170 = scmp.ne.s32.totalorder %s161, %s162
    %p171 = scmp.eq.s32.totalorder %s20, 0
    %p172 = por %p170, %p171
    %p173 = scmp.ne.s32.totalorder %s161, %s162
    %p174 = scmp.eq.s32.totalorder %s21, 1
    %p175 = por %p173, %p174
    %p177 = scmp.ne.s32.totalorder %s162, %s176
    %p178 = scmp.eq.s32.totalorder %s21, 0
    %p179 = por %p177, %p178
    %s181 = sadd.s32 %s180, 1
    %p184 = scmp.eq.s32.totalorder %s15, 1
    %p185 = scmp.ne.s32.totalorder %s180, %s182
    %p186 = scmp.eq.s32.totalorder %s15, 0
    %p187 = por %p185, %p186
    %p188 = scmp.ne.s32.totalorder %s180, %s182
    %p189 = scmp.eq.s32.totalorder %s20, 1
    %p190 = por %p188, %p189
    %p191 = scmp.ne.s32.totalorder %s182, %s183
    %p192 = scmp.eq.s32.totalorder %s20, 0
    %p193 = por %p191, %p192
    %p194 = scmp.ne.s32.totalorder %s182, %s183
    %p195 = scmp.eq.s32.totalorder %s21, 1
    %p196 = por %p194, %p195
    %p198 = scmp.ne.s32.totalorder %s183, %s197
    %p199 = scmp.eq.s32.totalorder %s21, 0
    %p200 = por %p198, %p199
    %s202 = sadd.s32 %s201, 1
    %p205 = scmp.eq.s32.totalorder %s15, 1
    %p206 = scmp.ne.s32.totalorder %s201, %s203
    %p207 = scmp.eq.s32.totalorder %s15, 0
    %p208 = por %p206, %p207
    %p209 = scmp.ne.s32.totalorder %s201, %s203
    %p210 = scmp.eq.s32.totalorder %s20, 1
    %p211 = por %p209, %p210
    %p212 = scmp.ne.s32.totalorder %s203, %s204
    %p213 = scmp.eq.s32.totalorder %s20, 0
    %p214 = por %p212, %p213
    %p215 = scmp.ne.s32.totalorder %s203, %s204
    %p216 = scmp.eq.s32.totalorder %s21, 1
    %p217 = por %p215, %p216
    %p219 = scmp.ne.s32.totalorder %s204, %s218
    %p220 = scmp.eq.s32.totalorder %s21, 0
    %p221 = por %p219, %p220
    %s222 = ssub.s32 %s15, %s22
    %p223 = scmp.eq.s32.totalorder %s222, 0
    %s225 = sadd.s32 %s224, 1
    %s226 = scalar_select %p223, %s224, %s225
    %p229 = pneg %p223
    %p230 = scmp.eq.s32.totalorder %s15, 1
    %p231 = por %p229, %p230
    %p232 = scmp.ne.s32.totalorder %s224, %s227
    %p233 = scmp.eq.s32.totalorder %s15, 0
    %p234 = por %p232, %p233
    %p235 = scmp.ne.s32.totalorder %s224, %s227
    %p236 = scmp.eq.s32.totalorder %s20, 1
    %p237 = por %p235, %p236
    %p238 = scmp.ne.s32.totalorder %s227, %s228
    %p239 = scmp.eq.s32.totalorder %s20, 0
    %p240 = por %p238, %p239
    %p241 = scmp.ne.s32.totalorder %s227, %s228
    %p242 = scmp.eq.s32.totalorder %s21, 1
    %p243 = por %p241, %p242
    %p245 = scmp.ne.s32.totalorder %s228, %s244
    %p246 = scmp.eq.s32.totalorder %s21, 0
    %p247 = por %p245, %p246
    %p248 = scmp.le.s32.totalorder 1, %s15
    %p249 = scmp.lt.s32.totalorder %s15, 3
    %p250 = pnand %p248, %p249
    %p251 = pneg %p250
    // Predicated region
    $region9: #{tpu_custom_call.1} parent=5 // pred_check
      _
    $region10: #{tpu_custom_call.1} parent=5 // pred_check_branch
      %253 = sbr.rel (%p250) target = $region12
    $region11: #{tpu_custom_call.1} parent=5 // pred_region
      %s254 = ssub.s32 %s15, 1
      // Predicated region
      $region13: #{tpu_custom_call.1} parent=11 // pred_check
        %p255 = pneg %p88
      $region14: #{tpu_custom_call.1} parent=11 // pred_check_branch
        %257 = sbr.rel (%p255) target = $region16
      $region15: #{tpu_custom_call.1} parent=11 // pred_region
        _
      $region16: #{tpu_custom_call.1} parent=11 // pred_fallthru
        _
      // Predicated region
      $region17: #{tpu_custom_call.1} parent=11 // pred_check
        %p258 = pneg %p109
      $region18: #{tpu_custom_call.1} parent=11 // pred_check_branch
        %260 = sbr.rel (%p258) target = $region20
      $region19: #{tpu_custom_call.1} parent=11 // pred_region
        _
      $region20: #{tpu_custom_call.1} parent=11 // pred_fallthru
        _
      // Predicated region
      $region21: #{tpu_custom_call.1} parent=11 // pred_check
        %p261 = pneg %p130
      $region22: #{tpu_custom_call.1} parent=11 // pred_check_branch
        %263 = sbr.rel (%p261) target = $region24
      $region23: #{tpu_custom_call.1} parent=11 // pred_region
        _
      $region24: #{tpu_custom_call.1} parent=11 // pred_fallthru
        _
      // Predicated region
      $region25: #{tpu_custom_call.1} parent=11 // pred_check
        %p264 = pneg %p151
      $region26: #{tpu_custom_call.1} parent=11 // pred_check_branch
        %266 = sbr.rel (%p264) target = $region28
      $region27: #{tpu_custom_call.1} parent=11 // pred_region
        _
      $region28: #{tpu_custom_call.1} parent=11 // pred_fallthru
        _
      // Predicated region
      $region29: #{tpu_custom_call.1} parent=11 // pred_check
        %p267 = pneg %p172
      $region30: #{tpu_custom_call.1} parent=11 // pred_check_branch
        %269 = sbr.rel (%p267) target = $region32
      $region31: #{tpu_custom_call.1} parent=11 // pred_region
        _
      $region32: #{tpu_custom_call.1} parent=11 // pred_fallthru
        _
      // Predicated region
      $region33: #{tpu_custom_call.1} parent=11 // pred_check
        %p270 = pneg %p193
      $region34: #{tpu_custom_call.1} parent=11 // pred_check_branch
        %272 = sbr.rel (%p270) target = $region36
      $region35: #{tpu_custom_call.1} parent=11 // pred_region
        _
      $region36: #{tpu_custom_call.1} parent=11 // pred_fallthru
        _
      // Predicated region
      $region37: #{tpu_custom_call.1} parent=11 // pred_check
        %p273 = pneg %p214
      $region38: #{tpu_custom_call.1} parent=11 // pred_check_branch
        %275 = sbr.rel (%p273) target = $region40
      $region39: #{tpu_custom_call.1} parent=11 // pred_region
        _
      $region40: #{tpu_custom_call.1} parent=11 // pred_fallthru
        _
    $region12: #{tpu_custom_call.1} parent=5 // pred_fallthru
      _
    %p276 = scmp.lt.s32.totalorder %s15, 2
    // Predicated region
    $region41: #{tpu_custom_call.1} parent=5 // pred_check
      %p277 = pneg %p276
    $region42: #{tpu_custom_call.1} parent=5 // pred_check_branch
      %279 = sbr.rel (%p277) target = $region44
    $region43: #{tpu_custom_call.1} parent=5 // pred_region
      // Predicated region
      $region45: #{tpu_custom_call.1} parent=43 // pred_check
        %p280 = pneg %p35
      $region46: #{tpu_custom_call.1} parent=43 // pred_check_branch
        %282 = sbr.rel (%p280) target = $region48
      $region47: #{tpu_custom_call.1} parent=43 // pred_region
        %s283 = smul.u32 16, %s15
        %p284 = scmp.lt.s32.totalorder %s283, 31
        %s285 = scalar_select %p284, %s283, 31
        %s286 = smul.addr %s285, 8
        %s287 = scalar_lea.vmem %s0, %s286
        %s288 = smul.u32 16, %s15
      $region48: #{tpu_custom_call.1} parent=43 // pred_fallthru
        _
      // Predicated region
      $region49: #{tpu_custom_call.1} parent=43 // pred_check
        %p289 = pneg %p61
      $region50: #{tpu_custom_call.1} parent=43 // pred_check_branch
        %291 = sbr.rel (%p289) target = $region52
      $region51: #{tpu_custom_call.1} parent=43 // pred_region
        %s292 = smul.u32 16, %s15
        %p293 = scmp.lt.s32.totalorder %s292, 31
        %s294 = scalar_select %p293, %s292, 31
        %s295 = smul.addr %s294, 8
        %s296 = scalar_lea.vmem %s1, %s295
        %s297 = smul.u32 16, %s15
      $region52: #{tpu_custom_call.1} parent=43 // pred_fallthru
        _
    $region44: #{tpu_custom_call.1} parent=5 // pred_fallthru
      _
    %p298 = scmp.le.s32.totalorder 1, %s15
    %p299 = scmp.lt.s32.totalorder %s15, 3
    %p300 = pnand %p298, %p299
    %p301 = pneg %p300
    // Predicated region
    $region53: #{tpu_custom_call.1} parent=5 // pred_check
      _
    $region54: #{tpu_custom_call.1} parent=5 // pred_check_branch
      %303 = sbr.rel (%p300) target = $region56
    $region55: #{tpu_custom_call.1} parent=5 // pred_region
      %s304 = ssub.s32 %s15, 1
      %s305 = smul.u32 16, %s20
      %p306 = scmp.lt.s32.totalorder %s305, 31
      %s307 = scalar_select %p306, %s305, 31
      %s308 = smul.addr %s307, 8
      %s309 = scalar_lea.vmem %s0, %s308
      %p310 = pneg %p41
      %p311 = pneg %p38
      %s312 = smul.u32 16, %s20
      %p313 = scmp.lt.s32.totalorder %s312, 31
      %s314 = scalar_select %p313, %s312, 31
      %s315 = smul.addr %s314, 8
      %s316 = scalar_lea.vmem %s1, %s315
      %p317 = pneg %p67
      %p318 = pneg %p64
      %p319 = pneg %p88
      %p320 = pneg %p85
      %p321 = pneg %p109
      %p322 = pneg %p106
      %p323 = pneg %p130
      %p324 = pneg %p127
      %p325 = pneg %p151
      %p326 = pneg %p148
      %p327 = pneg %p172
      %p328 = pneg %p169
      %p329 = pneg %p193
      %p330 = pneg %p190
      %p331 = pneg %p214
      %p332 = pneg %p211
      %p333 = pneg %p240
      %p334 = pneg %p237
      %s335 = smul.u32 16, %s20
      %p336 = scmp.lt.s32.totalorder %s335, 31
      %s337 = scalar_select %p336, %s335, 31
      %s338 = smul.addr %s337, 8
      %s339 = scalar_lea.vmem %s9, %s338
      %s340 = smul.u32 16, %s20
      %p341 = scmp.lt.s32.totalorder %s340, 31
      %s342 = scalar_select %p341, %s340, 31
      %s343 = smul.addr %s342, 8
      %s344 = scalar_lea.vmem %s0, %s343
      %s345 = smul.u32 16, %s20
      %s346 = smul.u32 16, %s20
      %p347 = scmp.lt.s32.totalorder %s346, 31
      %s348 = scalar_select %p347, %s346, 31
      %s349 = smul.addr %s348, 8
      %s350 = scalar_lea.vmem %s1, %s349
      %s351 = smul.u32 16, %s20
      %s352 = smul.u32 16, %s20
      %p353 = scmp.lt.s32.totalorder %s352, 31
      %s354 = scalar_select %p353, %s352, 31
      %s355 = smul.addr %s354, 8
      %s356 = scalar_lea.vmem %s9, %s355
      %s357 = smul.u32 16, %s20
      %v358 = vld [vmem:[%s344] sm:$0xff]
      %v359 = vld [vmem:[%s344 + $0x8] sm:$0xff]
      %v360 = vld [vmem:[%s344 + $0x10] sm:$0xff]
      %v361 = vld [vmem:[%s344 + $0x18] sm:$0xff]
      %v362 = vld [vmem:[%s344 + $0x20] sm:$0xff]
      %v363 = vld [vmem:[%s344 + $0x28] sm:$0xff]
      %v364 = vld [vmem:[%s344 + $0x30] sm:$0xff]
      %v365 = vld [vmem:[%s344 + $0x38] sm:$0xff]
      %v366 = vld [vmem:[%s344 + $0x40] sm:$0xff]
      %v367 = vld [vmem:[%s344 + $0x48] sm:$0xff]
      %v368 = vld [vmem:[%s344 + $0x50] sm:$0xff]
      %v369 = vld [vmem:[%s344 + $0x58] sm:$0xff]
      %v370 = vld [vmem:[%s344 + $0x60] sm:$0xff]
      %v371 = vld [vmem:[%s344 + $0x68] sm:$0xff]
      %v372 = vld [vmem:[%s344 + $0x70] sm:$0xff]
      %v373 = vld [vmem:[%s344 + $0x78] sm:$0xff]
      %v374 = vld [vmem:[%s350] sm:$0xff]
      %v375 = vld [vmem:[%s350 + $0x8] sm:$0xff]
      %v376 = vld [vmem:[%s350 + $0x10] sm:$0xff]
      %v377 = vld [vmem:[%s350 + $0x18] sm:$0xff]
      %v378 = vld [vmem:[%s350 + $0x20] sm:$0xff]
      %v379 = vld [vmem:[%s350 + $0x28] sm:$0xff]
      %v380 = vld [vmem:[%s350 + $0x30] sm:$0xff]
      %v381 = vld [vmem:[%s350 + $0x38] sm:$0xff]
      %v382 = vld [vmem:[%s350 + $0x40] sm:$0xff]
      %v383 = vld [vmem:[%s350 + $0x48] sm:$0xff]
      %v384 = vld [vmem:[%s350 + $0x50] sm:$0xff]
      %v385 = vld [vmem:[%s350 + $0x58] sm:$0xff]
      %v386 = vld [vmem:[%s350 + $0x60] sm:$0xff]
      %v387 = vld [vmem:[%s350 + $0x68] sm:$0xff]
      %v388 = vld [vmem:[%s350 + $0x70] sm:$0xff]
      %v389 = vld [vmem:[%s350 + $0x78] sm:$0xff]
      %v390 = vld [vmem:[%s2] sm:$0xff]
      %v391 = vld [vmem:[%s2 + $0x8] sm:$0xff]
      %v392 = vld [vmem:[%s2 + $0x10] sm:$0xff]
      %v393 = vld [vmem:[%s2 + $0x18] sm:$0xff]
      %v394 = vld [vmem:[%s3] sm:$0xff]
      %v395 = vld [vmem:[%s3 + $0x8] sm:$0xff]
      %v396 = vld [vmem:[%s3 + $0x10] sm:$0xff]
      %v397 = vld [vmem:[%s3 + $0x18] sm:$0xff]
      %vm398 = vcmask 261120
      %v400 = vsel %vm398, %v374, 0
      %v403 = vsel %vm398, %v375, 0
      %v406 = vsel %vm398, %v376, 0
      %v409 = vsel %vm398, %v377, 0
      %v412 = vsel %vm398, %v378, 0
      %v415 = vsel %vm398, %v379, 0
      %v418 = vsel %vm398, %v380, 0
      %v421 = vsel %vm398, %v381, 0
      %v424 = vsel %vm398, %v382, 0
      %v427 = vsel %vm398, %v383, 0
      %v430 = vsel %vm398, %v384, 0
      %v433 = vsel %vm398, %v385, 0
      %v436 = vsel %vm398, %v386, 0
      %v439 = vsel %vm398, %v387, 0
      %v442 = vsel %vm398, %v388, 0
      %v445 = vsel %vm398, %v389, 0
      %447 = vmatpush.msra.mxu0 0.0
      %448 = vmatpush.msra.mxu0 0.0
      %449 = vmatpush.msra.mxu0 0.0
      %450 = vmatpush.msra.mxu0 0.0
      %451 = vmatpush.msra.mxu0 0.0
      %452 = vmatpush.msra.mxu0 0.0
      %453 = vmatpush.msra.mxu0 0.0
      %454 = vmatpush.msra.mxu0 0.0
      %455 = vmatpush.msra.mxu0 0.0
      %456 = vmatpush.msra.mxu0 0.0
      %457 = vmatpush.msra.mxu0 0.0
      %458 = vmatpush.msra.mxu0 0.0
      %459 = vmatpush.msra.mxu0 %v397
      %460 = vmatpush.msra.mxu0 %v396
      %461 = vmatpush.msra.mxu0 %v395
      %462 = vmatpush.msra.mxu0 %v394
      %463 = vmatmul.f32.gmra.mxu0 %v400
      %v464 = vpop.f32.mrf.mxu0
      %v465 = vadd.f32 0.0, %v464
      %466 = vmatmul.f32.gmra.mxu0 %v403
      %v467 = vpop.f32.mrf.mxu0
      %v468 = vadd.f32 0.0, %v467
      %469 = vmatmul.f32.gmra.mxu0 %v406
      %v470 = vpop.f32.mrf.mxu0
      %v471 = vadd.f32 0.0, %v470
      %472 = vmatmul.f32.gmra.mxu0 %v409
      %v473 = vpop.f32.mrf.mxu0
      %v474 = vadd.f32 0.0, %v473
      %475 = vmatmul.f32.gmra.mxu0 %v412
      %v476 = vpop.f32.mrf.mxu0
      %v477 = vadd.f32 0.0, %v476
      %478 = vmatmul.f32.gmra.mxu0 %v415
      %v479 = vpop.f32.mrf.mxu0
      %v480 = vadd.f32 0.0, %v479
      %481 = vmatmul.f32.gmra.mxu0 %v418
      %v482 = vpop.f32.mrf.mxu0
      %v483 = vadd.f32 0.0, %v482
      %484 = vmatmul.f32.gmra.mxu0 %v421
      %v485 = vpop.f32.mrf.mxu0
      %v486 = vadd.f32 0.0, %v485
      %487 = vmatmul.f32.gmra.mxu0 %v424
      %v488 = vpop.f32.mrf.mxu0
      %v489 = vadd.f32 0.0, %v488
      %490 = vmatmul.f32.gmra.mxu0 %v427
      %v491 = vpop.f32.mrf.mxu0
      %v492 = vadd.f32 0.0, %v491
      %493 = vmatmul.f32.gmra.mxu0 %v430
      %v494 = vpop.f32.mrf.mxu0
      %v495 = vadd.f32 0.0, %v494
      %496 = vmatmul.f32.gmra.mxu0 %v433
      %v497 = vpop.f32.mrf.mxu0
      %v498 = vadd.f32 0.0, %v497
      %499 = vmatmul.f32.gmra.mxu0 %v436
      %v500 = vpop.f32.mrf.mxu0
      %v501 = vadd.f32 0.0, %v500
      %502 = vmatmul.f32.gmra.mxu0 %v439
      %v503 = vpop.f32.mrf.mxu0
      %v504 = vadd.f32 0.0, %v503
      %505 = vmatmul.f32.gmra.mxu0 %v442
      %v506 = vpop.f32.mrf.mxu0
      %v507 = vadd.f32 0.0, %v506
      %508 = vmatmul.f32.gmra.mxu0 %v445
      %v509 = vpop.f32.mrf.mxu0
      %v510 = vadd.f32 0.0, %v509
      %511 = vdwg.mxu0
      %v513 = vsel %vm398, %v358, 0
      %v516 = vsel %vm398, %v359, 0
      %v519 = vsel %vm398, %v360, 0
      %v522 = vsel %vm398, %v361, 0
      %v525 = vsel %vm398, %v362, 0
      %v528 = vsel %vm398, %v363, 0
      %v531 = vsel %vm398, %v364, 0
      %v534 = vsel %vm398, %v365, 0
      %v537 = vsel %vm398, %v366, 0
      %v540 = vsel %vm398, %v367, 0
      %v543 = vsel %vm398, %v368, 0
      %v546 = vsel %vm398, %v369, 0
      %v549 = vsel %vm398, %v370, 0
      %v552 = vsel %vm398, %v371, 0
      %v555 = vsel %vm398, %v372, 0
      %v558 = vsel %vm398, %v373, 0
      %560 = vmatpush.msra.mxu0 0.0
      %561 = vmatpush.msra.mxu0 0.0
      %562 = vmatpush.msra.mxu0 0.0
      %563 = vmatpush.msra.mxu0 0.0
      %564 = vmatpush.msra.mxu0 0.0
      %565 = vmatpush.msra.mxu0 0.0
      %566 = vmatpush.msra.mxu0 0.0
      %567 = vmatpush.msra.mxu0 0.0
      %568 = vmatpush.msra.mxu0 0.0
      %569 = vmatpush.msra.mxu0 0.0
      %570 = vmatpush.msra.mxu0 0.0
      %571 = vmatpush.msra.mxu0 0.0
      %572 = vmatpush.msra.mxu0 %v393
      %573 = vmatpush.msra.mxu0 %v392
      %574 = vmatpush.msra.mxu0 %v391
      %575 = vmatpush.msra.mxu0 %v390
      %576 = vmatmul.f32.gmra.mxu0 %v513
      %v577 = vpop.f32.mrf.mxu0
      %v578 = vadd.f32 %v465, %v577
      %579 = vmatmul.f32.gmra.mxu0 %v516
      %v580 = vpop.f32.mrf.mxu0
      %v581 = vadd.f32 %v468, %v580
      %582 = vmatmul.f32.gmra.mxu0 %v519
      %v583 = vpop.f32.mrf.mxu0
      %v584 = vadd.f32 %v471, %v583
      %585 = vmatmul.f32.gmra.mxu0 %v522
      %v586 = vpop.f32.mrf.mxu0
      %v587 = vadd.f32 %v474, %v586
      %588 = vmatmul.f32.gmra.mxu0 %v525
      %v589 = vpop.f32.mrf.mxu0
      %v590 = vadd.f32 %v477, %v589
      %591 = vmatmul.f32.gmra.mxu0 %v528
      %v592 = vpop.f32.mrf.mxu0
      %v593 = vadd.f32 %v480, %v592
      %594 = vmatmul.f32.gmra.mxu0 %v531
      %v595 = vpop.f32.mrf.mxu0
      %v596 = vadd.f32 %v483, %v595
      %597 = vmatmul.f32.gmra.mxu0 %v534
      %v598 = vpop.f32.mrf.mxu0
      %v599 = vadd.f32 %v486, %v598
      %600 = vmatmul.f32.gmra.mxu0 %v537
      %v601 = vpop.f32.mrf.mxu0
      %v602 = vadd.f32 %v489, %v601
      %603 = vmatmul.f32.gmra.mxu0 %v540
      %v604 = vpop.f32.mrf.mxu0
      %v605 = vadd.f32 %v492, %v604
      %606 = vmatmul.f32.gmra.mxu0 %v543
      %v607 = vpop.f32.mrf.mxu0
      %v608 = vadd.f32 %v495, %v607
      %609 = vmatmul.f32.gmra.mxu0 %v546
      %v610 = vpop.f32.mrf.mxu0
      %v611 = vadd.f32 %v498, %v610
      %612 = vmatmul.f32.gmra.mxu0 %v549
      %v613 = vpop.f32.mrf.mxu0
      %v614 = vadd.f32 %v501, %v613
      %615 = vmatmul.f32.gmra.mxu0 %v552
      %v616 = vpop.f32.mrf.mxu0
      %v617 = vadd.f32 %v504, %v616
      %618 = vmatmul.f32.gmra.mxu0 %v555
      %v619 = vpop.f32.mrf.mxu0
      %v620 = vadd.f32 %v507, %v619
      %621 = vmatmul.f32.gmra.mxu0 %v558
      %v622 = vpop.f32.mrf.mxu0
      %v623 = vadd.f32 %v510, %v622
      %624 = vdwg.mxu0
      %v625 = vld [vmem:[%s4] sm:$0x1]
      %v627 = vperm.slane %v625, 0
      %v629 = vadd.f32 %v578, %v627
      %v630 = vadd.f32 %v581, %v627
      %v631 = vadd.f32 %v584, %v627
      %v632 = vadd.f32 %v587, %v627
      %v633 = vadd.f32 %v590, %v627
      %v634 = vadd.f32 %v593, %v627
      %v635 = vadd.f32 %v596, %v627
      %v636 = vadd.f32 %v599, %v627
      %v637 = vadd.f32 %v602, %v627
      %v638 = vadd.f32 %v605, %v627
      %v639 = vadd.f32 %v608, %v627
      %v640 = vadd.f32 %v611, %v627
      %v641 = vadd.f32 %v614, %v627
      %v642 = vadd.f32 %v617, %v627
      %v643 = vadd.f32 %v620, %v627
      %v644 = vadd.f32 %v623, %v627
      %v645 = vsub.f32 0.0, %v629
      %v646 = vsub.f32 0.0, %v630
      %v647 = vsub.f32 0.0, %v631
      %v648 = vsub.f32 0.0, %v632
      %v649 = vsub.f32 0.0, %v633
      %v650 = vsub.f32 0.0, %v634
      %v651 = vsub.f32 0.0, %v635
      %v652 = vsub.f32 0.0, %v636
      %v653 = vsub.f32 0.0, %v637
      %v654 = vsub.f32 0.0, %v638
      %v655 = vsub.f32 0.0, %v639
      %v656 = vsub.f32 0.0, %v640
      %v657 = vsub.f32 0.0, %v641
      %v658 = vsub.f32 0.0, %v642
      %v659 = vsub.f32 0.0, %v643
      %v660 = vsub.f32 0.0, %v644
      %v661 = vmul.f32 %v645, 1.442695
      %v662 = vpow.pop %v661
      %v663 = vmul.f32 %v646, 1.442695
      %v664 = vpow.pop %v663
      %v665 = vmul.f32 %v647, 1.442695
      %v666 = vpow.pop %v665
      %v667 = vmul.f32 %v648, 1.442695
      %v668 = vpow.pop %v667
      %v669 = vmul.f32 %v649, 1.442695
      %v670 = vpow.pop %v669
      %v671 = vmul.f32 %v650, 1.442695
      %v672 = vpow.pop %v671
      %v673 = vmul.f32 %v651, 1.442695
      %v674 = vpow.pop %v673
      %v675 = vmul.f32 %v652, 1.442695
      %v676 = vpow.pop %v675
      %v677 = vmul.f32 %v653, 1.442695
      %v678 = vpow.pop %v677
      %v679 = vmul.f32 %v654, 1.442695
      %v680 = vpow.pop %v679
      %v681 = vmul.f32 %v655, 1.442695
      %v682 = vpow.pop %v681
      %v683 = vmul.f32 %v656, 1.442695
      %v684 = vpow.pop %v683
      %v685 = vmul.f32 %v657, 1.442695
      %v686 = vpow.pop %v685
      %v687 = vmul.f32 %v658, 1.442695
      %v688 = vpow.pop %v687
      %v689 = vmul.f32 %v659, 1.442695
      %v690 = vpow.pop %v689
      %v691 = vmul.f32 %v660, 1.442695
      %v692 = vpow.pop %v691
      %v693 = vadd.f32 %v662, 1.0
      %v694 = vadd.f32 %v664, 1.0
      %v695 = vadd.f32 %v666, 1.0
      %v696 = vadd.f32 %v668, 1.0
      %v697 = vadd.f32 %v670, 1.0
      %v698 = vadd.f32 %v672, 1.0
      %v699 = vadd.f32 %v674, 1.0
      %v700 = vadd.f32 %v676, 1.0
      %v701 = vadd.f32 %v678, 1.0
      %v702 = vadd.f32 %v680, 1.0
      %v703 = vadd.f32 %v682, 1.0
      %v704 = vadd.f32 %v684, 1.0
      %v705 = vadd.f32 %v686, 1.0
      %v706 = vadd.f32 %v688, 1.0
      %v707 = vadd.f32 %v690, 1.0
      %v708 = vadd.f32 %v692, 1.0
      %v709 = vrcp.pop %v693
      %v710 = vrcp.pop %v694
      %v711 = vrcp.pop %v695
      %v712 = vrcp.pop %v696
      %v713 = vrcp.pop %v697
      %v714 = vrcp.pop %v698
      %v715 = vrcp.pop %v699
      %v716 = vrcp.pop %v700
      %v717 = vrcp.pop %v701
      %v718 = vrcp.pop %v702
      %v719 = vrcp.pop %v703
      %v720 = vrcp.pop %v704
      %v721 = vrcp.pop %v705
      %v722 = vrcp.pop %v706
      %v723 = vrcp.pop %v707
      %v724 = vrcp.pop %v708
      %v725 = vsub.f32 %v358, %v374
      %v726 = vsub.f32 %v359, %v375
      %v727 = vsub.f32 %v360, %v376
      %v728 = vsub.f32 %v361, %v377
      %v729 = vsub.f32 %v362, %v378
      %v730 = vsub.f32 %v363, %v379
      %v731 = vsub.f32 %v364, %v380
      %v732 = vsub.f32 %v365, %v381
      %v733 = vsub.f32 %v366, %v382
      %v734 = vsub.f32 %v367, %v383
      %v735 = vsub.f32 %v368, %v384
      %v736 = vsub.f32 %v369, %v385
      %v737 = vsub.f32 %v370, %v386
      %v738 = vsub.f32 %v371, %v387
      %v739 = vsub.f32 %v372, %v388
      %v740 = vsub.f32 %v373, %v389
      %v741 = vmul.f32 %v709, %v725
      %v742 = vmul.f32 %v710, %v726
      %v743 = vmul.f32 %v711, %v727
      %v744 = vmul.f32 %v712, %v728
      %v745 = vmul.f32 %v713, %v729
      %v746 = vmul.f32 %v714, %v730
      %v747 = vmul.f32 %v715, %v731
      %v748 = vmul.f32 %v716, %v732
      %v749 = vmul.f32 %v717, %v733
      %v750 = vmul.f32 %v718, %v734
      %v751 = vmul.f32 %v719, %v735
      %v752 = vmul.f32 %v720, %v736
      %v753 = vmul.f32 %v721, %v737
      %v754 = vmul.f32 %v722, %v738
      %v755 = vmul.f32 %v723, %v739
      %v756 = vmul.f32 %v724, %v740
      %v757 = vadd.f32 %v374, %v741
      %v758 = vadd.f32 %v375, %v742
      %v759 = vadd.f32 %v376, %v743
      %v760 = vadd.f32 %v377, %v744
      %v761 = vadd.f32 %v378, %v745
      %v762 = vadd.f32 %v379, %v746
      %v763 = vadd.f32 %v380, %v747
      %v764 = vadd.f32 %v381, %v748
      %v765 = vadd.f32 %v382, %v749
      %v766 = vadd.f32 %v383, %v750
      %v767 = vadd.f32 %v384, %v751
      %v768 = vadd.f32 %v385, %v752
      %v769 = vadd.f32 %v386, %v753
      %v770 = vadd.f32 %v387, %v754
      %v771 = vadd.f32 %v388, %v755
      %v772 = vadd.f32 %v389, %v756
      %v773 = vld [vmem:[%s5] sm:$0xff]
      %v774 = vld [vmem:[%s5 + $0x8] sm:$0xff]
      %v775 = vld [vmem:[%s5 + $0x10] sm:$0xff]
      %v776 = vld [vmem:[%s5 + $0x18] sm:$0xff]
      %v777 = vld [vmem:[%s6] sm:$0x1]
      %v779 = vperm.slane %v777, 0
      %v782 = vsel %vm398, %v757, 0
      %v785 = vsel %vm398, %v758, 0
      %v788 = vsel %vm398, %v759, 0
      %v791 = vsel %vm398, %v760, 0
      %v794 = vsel %vm398, %v761, 0
      %v797 = vsel %vm398, %v762, 0
      %v800 = vsel %vm398, %v763, 0
      %v803 = vsel %vm398, %v764, 0
      %v806 = vsel %vm398, %v765, 0
      %v809 = vsel %vm398, %v766, 0
      %v812 = vsel %vm398, %v767, 0
      %v815 = vsel %vm398, %v768, 0
      %v818 = vsel %vm398, %v769, 0
      %v821 = vsel %vm398, %v770, 0
      %v824 = vsel %vm398, %v771, 0
      %v827 = vsel %vm398, %v772, 0
      %829 = vmatpush.msra.mxu0 0.0
      %830 = vmatpush.msra.mxu0 0.0
      %831 = vmatpush.msra.mxu0 0.0
      %832 = vmatpush.msra.mxu0 0.0
      %833 = vmatpush.msra.mxu0 0.0
      %834 = vmatpush.msra.mxu0 0.0
      %835 = vmatpush.msra.mxu0 0.0
      %836 = vmatpush.msra.mxu0 0.0
      %837 = vmatpush.msra.mxu0 0.0
      %838 = vmatpush.msra.mxu0 0.0
      %839 = vmatpush.msra.mxu0 0.0
      %840 = vmatpush.msra.mxu0 0.0
      %841 = vmatpush.msra.mxu0 %v776
      %842 = vmatpush.msra.mxu0 %v775
      %843 = vmatpush.msra.mxu0 %v774
      %844 = vmatpush.msra.mxu0 %v773
      %845 = vmatmul.f32.gmra.mxu0 %v782
      %v846 = vpop.f32.mrf.mxu0
      %v847 = vadd.f32 %v779, %v846
      %848 = vmatmul.f32.gmra.mxu0 %v785
      %v849 = vpop.f32.mrf.mxu0
      %v850 = vadd.f32 %v779, %v849
      %851 = vmatmul.f32.gmra.mxu0 %v788
      %v852 = vpop.f32.mrf.mxu0
      %v853 = vadd.f32 %v779, %v852
      %854 = vmatmul.f32.gmra.mxu0 %v791
      %v855 = vpop.f32.mrf.mxu0
      %v856 = vadd.f32 %v779, %v855
      %857 = vmatmul.f32.gmra.mxu0 %v794
      %v858 = vpop.f32.mrf.mxu0
      %v859 = vadd.f32 %v779, %v858
      %860 = vmatmul.f32.gmra.mxu0 %v797
      %v861 = vpop.f32.mrf.mxu0
      %v862 = vadd.f32 %v779, %v861
      %863 = vmatmul.f32.gmra.mxu0 %v800
      %v864 = vpop.f32.mrf.mxu0
      %v865 = vadd.f32 %v779, %v864
      %866 = vmatmul.f32.gmra.mxu0 %v803
      %v867 = vpop.f32.mrf.mxu0
      %v868 = vadd.f32 %v779, %v867
      %869 = vmatmul.f32.gmra.mxu0 %v806
      %v870 = vpop.f32.mrf.mxu0
      %v871 = vadd.f32 %v779, %v870
      %872 = vmatmul.f32.gmra.mxu0 %v809
      %v873 = vpop.f32.mrf.mxu0
      %v874 = vadd.f32 %v779, %v873
      %875 = vmatmul.f32.gmra.mxu0 %v812
      %v876 = vpop.f32.mrf.mxu0
      %v877 = vadd.f32 %v779, %v876
      %878 = vmatmul.f32.gmra.mxu0 %v815
      %v879 = vpop.f32.mrf.mxu0
      %v880 = vadd.f32 %v779, %v879
      %881 = vmatmul.f32.gmra.mxu0 %v818
      %v882 = vpop.f32.mrf.mxu0
      %v883 = vadd.f32 %v779, %v882
      %884 = vmatmul.f32.gmra.mxu0 %v821
      %v885 = vpop.f32.mrf.mxu0
      %v886 = vadd.f32 %v779, %v885
      %887 = vmatmul.f32.gmra.mxu0 %v824
      %v888 = vpop.f32.mrf.mxu0
      %v889 = vadd.f32 %v779, %v888
      %890 = vmatmul.f32.gmra.mxu0 %v827
      %v891 = vpop.f32.mrf.mxu0
      %v892 = vadd.f32 %v779, %v891
      %893 = vdwg.mxu0
      %v894 = vmax.f32 %v847, 0.0
      %v895 = vmax.f32 %v850, 0.0
      %v896 = vmax.f32 %v853, 0.0
      %v897 = vmax.f32 %v856, 0.0
      %v898 = vmax.f32 %v859, 0.0
      %v899 = vmax.f32 %v862, 0.0
      %v900 = vmax.f32 %v865, 0.0
      %v901 = vmax.f32 %v868, 0.0
      %v902 = vmax.f32 %v871, 0.0
      %v903 = vmax.f32 %v874, 0.0
      %v904 = vmax.f32 %v877, 0.0
      %v905 = vmax.f32 %v880, 0.0
      %v906 = vmax.f32 %v883, 0.0
      %v907 = vmax.f32 %v886, 0.0
      %v908 = vmax.f32 %v889, 0.0
      %v909 = vmax.f32 %v892, 0.0
      %v910 = vld [vmem:[%s7] sm:$0xff]
      %v911 = vld [vmem:[%s7 + $0x8] sm:$0xff]
      %v912 = vld [vmem:[%s7 + $0x10] sm:$0xff]
      %v913 = vld [vmem:[%s7 + $0x18] sm:$0xff]
      %v914 = vld [vmem:[%s8] sm:$0x1]
      %v916 = vperm.slane %v914, 0
      %v919 = vsel %vm398, %v894, 0
      %v922 = vsel %vm398, %v895, 0
      %v925 = vsel %vm398, %v896, 0
      %v928 = vsel %vm398, %v897, 0
      %v931 = vsel %vm398, %v898, 0
      %v934 = vsel %vm398, %v899, 0
      %v937 = vsel %vm398, %v900, 0
      %v940 = vsel %vm398, %v901, 0
      %v943 = vsel %vm398, %v902, 0
      %v946 = vsel %vm398, %v903, 0
      %v949 = vsel %vm398, %v904, 0
      %v952 = vsel %vm398, %v905, 0
      %v955 = vsel %vm398, %v906, 0
      %v958 = vsel %vm398, %v907, 0
      %v961 = vsel %vm398, %v908, 0
      %v964 = vsel %vm398, %v909, 0
      %966 = vmatpush.msra.mxu0 0.0
      %967 = vmatpush.msra.mxu0 0.0
      %968 = vmatpush.msra.mxu0 0.0
      %969 = vmatpush.msra.mxu0 0.0
      %970 = vmatpush.msra.mxu0 0.0
      %971 = vmatpush.msra.mxu0 0.0
      %972 = vmatpush.msra.mxu0 0.0
      %973 = vmatpush.msra.mxu0 0.0
      %974 = vmatpush.msra.mxu0 0.0
      %975 = vmatpush.msra.mxu0 0.0
      %976 = vmatpush.msra.mxu0 0.0
      %977 = vmatpush.msra.mxu0 0.0
      %978 = vmatpush.msra.mxu0 %v913
      %979 = vmatpush.msra.mxu0 %v912
      %980 = vmatpush.msra.mxu0 %v911
      %981 = vmatpush.msra.mxu0 %v910
      %982 = vmatmul.f32.gmra.mxu0 %v919
      %v983 = vpop.f32.mrf.mxu0
      %v984 = vadd.f32 %v916, %v983
      %985 = vmatmul.f32.gmra.mxu0 %v922
      %v986 = vpop.f32.mrf.mxu0
      %v987 = vadd.f32 %v916, %v986
      %988 = vmatmul.f32.gmra.mxu0 %v925
      %v989 = vpop.f32.mrf.mxu0
      %v990 = vadd.f32 %v916, %v989
      %991 = vmatmul.f32.gmra.mxu0 %v928
      %v992 = vpop.f32.mrf.mxu0
      %v993 = vadd.f32 %v916, %v992
      %994 = vmatmul.f32.gmra.mxu0 %v931
      %v995 = vpop.f32.mrf.mxu0
      %v996 = vadd.f32 %v916, %v995
      %997 = vmatmul.f32.gmra.mxu0 %v934
      %v998 = vpop.f32.mrf.mxu0
      %v999 = vadd.f32 %v916, %v998
      %1000 = vmatmul.f32.gmra.mxu0 %v937
      %v1001 = vpop.f32.mrf.mxu0
      %v1002 = vadd.f32 %v916, %v1001
      %1003 = vmatmul.f32.gmra.mxu0 %v940
      %v1004 = vpop.f32.mrf.mxu0
      %v1005 = vadd.f32 %v916, %v1004
      %1006 = vmatmul.f32.gmra.mxu0 %v943
      %v1007 = vpop.f32.mrf.mxu0
      %v1008 = vadd.f32 %v916, %v1007
      %1009 = vmatmul.f32.gmra.mxu0 %v946
      %v1010 = vpop.f32.mrf.mxu0
      %v1011 = vadd.f32 %v916, %v1010
      %1012 = vmatmul.f32.gmra.mxu0 %v949
      %v1013 = vpop.f32.mrf.mxu0
      %v1014 = vadd.f32 %v916, %v1013
      %1015 = vmatmul.f32.gmra.mxu0 %v952
      %v1016 = vpop.f32.mrf.mxu0
      %v1017 = vadd.f32 %v916, %v1016
      %1018 = vmatmul.f32.gmra.mxu0 %v955
      %v1019 = vpop.f32.mrf.mxu0
      %v1020 = vadd.f32 %v916, %v1019
      %1021 = vmatmul.f32.gmra.mxu0 %v958
      %v1022 = vpop.f32.mrf.mxu0
      %v1023 = vadd.f32 %v916, %v1022
      %1024 = vmatmul.f32.gmra.mxu0 %v961
      %v1025 = vpop.f32.mrf.mxu0
      %v1026 = vadd.f32 %v916, %v1025
      %1027 = vmatmul.f32.gmra.mxu0 %v964
      %v1028 = vpop.f32.mrf.mxu0
      %v1029 = vadd.f32 %v916, %v1028
      %1030 = vdwg.mxu0
      %vm1031 = vcmask 326656
      %1032 = vst.msk [vmem:[%s356] sm:$0xff] %vm1031, %v984
      %1033 = vst.msk [vmem:[%s356 + $0x8] sm:$0xff] %vm1031, %v987
      %1034 = vst.msk [vmem:[%s356 + $0x10] sm:$0xff] %vm1031, %v990
      %1035 = vst.msk [vmem:[%s356 + $0x18] sm:$0xff] %vm1031, %v993
      %1036 = vst.msk [vmem:[%s356 + $0x20] sm:$0xff] %vm1031, %v996
      %1037 = vst.msk [vmem:[%s356 + $0x28] sm:$0xff] %vm1031, %v999
      %1038 = vst.msk [vmem:[%s356 + $0x30] sm:$0xff] %vm1031, %v1002
      %1039 = vst.msk [vmem:[%s356 + $0x38] sm:$0xff] %vm1031, %v1005
      %1040 = vst.msk [vmem:[%s356 + $0x40] sm:$0xff] %vm1031, %v1008
      %1041 = vst.msk [vmem:[%s356 + $0x48] sm:$0xff] %vm1031, %v1011
      %1042 = vst.msk [vmem:[%s356 + $0x50] sm:$0xff] %vm1031, %v1014
      %1043 = vst.msk [vmem:[%s356 + $0x58] sm:$0xff] %vm1031, %v1017
      %1044 = vst.msk [vmem:[%s356 + $0x60] sm:$0xff] %vm1031, %v1020
      %1045 = vst.msk [vmem:[%s356 + $0x68] sm:$0xff] %vm1031, %v1023
      %1046 = vst.msk [vmem:[%s356 + $0x70] sm:$0xff] %vm1031, %v1026
      %1047 = vst.msk [vmem:[%s356 + $0x78] sm:$0xff] %vm1031, %v1029
      %s1048 = smul.u32 16, %s20
      %p1049 = scmp.lt.s32.totalorder %s1048, 31
      %s1050 = scalar_select %p1049, %s1048, 31
      %s1051 = smul.addr %s1050, 8
      %s1052 = scalar_lea.vmem %s9, %s1051
      // Predicated region
      $region57: #{tpu_custom_call.1} parent=55 // pred_check
        %p1053 = pneg %p237
      $region58: #{tpu_custom_call.1} parent=55 // pred_check_branch
        %1055 = sbr.rel (%p1053) target = $region60
      $region59: #{tpu_custom_call.1} parent=55 // pred_region
        %s1056 = smul.u32 16, %s20
      $region60: #{tpu_custom_call.1} parent=55 // pred_fallthru
        _
    $region56: #{tpu_custom_call.1} parent=5 // pred_fallthru
      _
    %p1057 = scmp.le.s32.totalorder 2, %s15
    // Predicated region
    $region61: #{tpu_custom_call.1} parent=5 // pred_check
      %p1058 = pneg %p1057
    $region62: #{tpu_custom_call.1} parent=5 // pred_check_branch
      %1060 = sbr.rel (%p1058) target = $region64
    $region63: #{tpu_custom_call.1} parent=5 // pred_region
      %s1061 = ssub.s32 %s15, 2
      // Predicated region
      $region65: #{tpu_custom_call.1} parent=63 // pred_check
        %p1062 = pneg %p243
      $region66: #{tpu_custom_call.1} parent=63 // pred_check_branch
        %1064 = sbr.rel (%p1062) target = $region68
      $region67: #{tpu_custom_call.1} parent=63 // pred_region
        %s1065 = smul.u32 16, %s21
        %p1066 = scmp.lt.s32.totalorder %s1065, 31
        %s1067 = scalar_select %p1066, %s1065, 31
        %s1068 = smul.addr %s1067, 8
        %s1069 = scalar_lea.vmem %s9, %s1068
      $region68: #{tpu_custom_call.1} parent=63 // pred_fallthru
        _
    $region64: #{tpu_custom_call.1} parent=5 // pred_fallthru
      _
  $region6: #{tpu_custom_call.1} parent=0 // loop_footer
    %s19 = sadd.s32 1, %s15
  $region7: #{tpu_custom_call.1} parent=0 // loop_footer_branch
    %14 = sbr.rel target = $region3
  $region8: #{tpu_custom_call.1} parent=0 // loop_exit
    _

</llo_original>
